<compile_context>
chip_gen: v7x
topology: tpu7x:2x2x1
jax: 0.10.0
libtpu: 0.0.40
codegen_flags: <defaults>
</compile_context>

<pallas_src>
import jax
import jax.numpy as jnp
from jax.experimental import pallas as pl
from jax.experimental.pallas import tpu as pltpu


def _round_up(x, m):
    return ((x + m - 1) // m) * m


def decoder_kernel(z_ref, c_ref, w1_ref, b1_ref, w2_ref, b2_ref, o_ref, x_ref):
    """Fused MLP tile: o = relu([z, c] @ W1 + b1) @ W2 + b2.

    torch.cat is fused in-kernel: the z / c tiles are written into one
    [bm, n_latents + n_cond] VMEM staging buffer so layer 1 is a single
    K=(n_latents+n_cond) MXU pass instead of two half-K passes plus an
    extra [bm, 512] f32 add.  Matmul operands are bf16 (MXU native);
    accumulation stays f32.

    z_ref : [bm, n_latents]            f32 batch tile
    c_ref : [bm, n_cond]               f32 batch tile
    w1_ref: [n_latents+n_cond, 512]    bf16 (resident, constant index map)
    b1_ref: [1, 512]                   f32
    w2_ref: [512, n_out_pad]           bf16 (resident)
    b2_ref: [1, n_out_pad]             f32
    o_ref : [bm, n_out_pad]            f32 (lane-dense: n_out_pad % 128 == 0)
    x_ref : [bm, n_latents+n_cond]     f32 VMEM scratch (fused concat buffer)
    """
    nz = z_ref.shape[1]
    x_ref[:, :nz] = z_ref[...]          # fused torch.cat((z, c), dim=1)
    x_ref[:, nz:] = c_ref[...]
    x = x_ref[...].astype(jnp.bfloat16)

    h = jnp.dot(x, w1_ref[...], preferred_element_type=jnp.float32)
    h = jnp.maximum(h + b1_ref[...], 0.0)                           # bias + ReLU

    o = jnp.dot(h.astype(jnp.bfloat16), w2_ref[...],
                preferred_element_type=jnp.float32) + b2_ref[...]
    o_ref[...] = o.astype(o_ref.dtype)


def decoder_forward(z, c, params, *, bm=2048):
    """Pallas wrapper reproducing Decoder.forward(z, c)."""
    w1, b1, w2, b2 = params["w1"], params["b1"], params["w2"], params["b2"]

    B, n_latents = z.shape
    n_cond = c.shape[1]
    k_in = n_latents + n_cond
    H = w1.shape[1]
    n_out = w2.shape[1]
    out_dtype = z.dtype

    # ---- batch tile ------------------------------------------------------
    #  * at most `bm` rows (bm=2048 -> ~8 MB of VMEM, safe on every gen
    #    including v7x's 64 MiB),
    #  * split into >=2 grid steps whenever B allows it so v7x's two
    #    TensorCores both get work,
    #  * no wrapper-side batch padding: ragged last block is masked on
    #    writeback (rows are independent, so garbage tail rows are dropped).
    if B > 8:
        bm_eff = min(bm, _round_up(pl.cdiv(B, 2), 8))
    else:
        bm_eff = _round_up(max(B, 1), 8)
    grid = (pl.cdiv(B, bm_eff),)

    # ---- lane-dense output: pad n_out up to a multiple of 128 -------------
    n_out_pad = _round_up(n_out, 128)
    if n_out_pad != n_out:
        w2 = jnp.pad(w2, ((0, 0), (0, n_out_pad - n_out)))
        b2 = jnp.pad(b2, ((0, 0), (0, n_out_pad - n_out)))

    # Weights bf16 (MXU native, halves resident-weight footprint); biases f32.
    w1 = w1.astype(jnp.bfloat16)
    w2 = w2.astype(jnp.bfloat16)
    b1 = b1.astype(jnp.float32)
    b2 = b2.astype(jnp.float32)

    cost = pl.CostEstimate(
        flops=2 * B * (k_in * H + H * n_out_pad),
        transcendentals=0,
        bytes_accessed=(B * k_in * 4                       # z + c
                        + (k_in * H + H * n_out_pad) * 2   # bf16 weights
                        + (H + n_out_pad) * 4              # biases
                        + B * n_out_pad * 4),              # output
    )

    out = pl.pallas_call(
        decoder_kernel,
        out_shape=jax.ShapeDtypeStruct((B, n_out_pad), out_dtype),
        grid_spec=pltpu.PrefetchScalarGridSpec(
            num_scalar_prefetch=0,
            grid=grid,
            in_specs=[
                pl.BlockSpec((bm_eff, n_latents), lambda i: (i, 0)),  # z tile
                pl.BlockSpec((bm_eff, n_cond), lambda i: (i, 0)),     # c tile
                pl.BlockSpec((k_in, H), lambda i: (0, 0)),            # W1 (resident)
                pl.BlockSpec((1, H), lambda i: (0, 0)),               # b1
                pl.BlockSpec((H, n_out_pad), lambda i: (0, 0)),       # W2 (resident)
                pl.BlockSpec((1, n_out_pad), lambda i: (0, 0)),       # b2
            ],
            out_specs=pl.BlockSpec((bm_eff, n_out_pad), lambda i: (i, 0)),
            scratch_shapes=[pltpu.VMEM((bm_eff, k_in), jnp.float32)],  # concat buf
        ),
        compiler_params=pltpu.CompilerParams(
            dimension_semantics=("parallel",),   # batch axis -> both TCs on v7x
        ),
        cost_estimate=cost,
    )(z, c, w1, b1, w2, b2)

    if n_out_pad != n_out:
        out = out[:, :n_out]
    return out


def init_decoder_params(key, n_inputs, n_latents, n_cond, dtype=jnp.float32):
    """Deterministic parameter init (same shapes as the torch module)."""
    f_in = n_latents + n_cond
    hidden = 512
    k1, k2, k3, k4 = jax.random.split(key, 4)
    bnd1 = 1.0 / jnp.sqrt(f_in)
    bnd2 = 1.0 / jnp.sqrt(hidden)
    return {
        # stored as [in, out] = torch weight.T, so the kernel computes x @ W + b
        "w1": jax.random.uniform(k1, (f_in, hidden), dtype, -bnd1, bnd1),
        "b1": jax.random.uniform(k2, (1, hidden), dtype, -bnd1, bnd1),
        "w2": jax.random.uniform(k3, (hidden, n_inputs), dtype, -bnd2, bnd2),
        "b2": jax.random.uniform(k4, (1, n_inputs), dtype, -bnd2, bnd2),
    }


def decoder_reference(z, c, params):
    """Pure-JAX f32 reference for correctness checking."""
    x = jnp.concatenate([z, c], axis=1)
    h = jnp.maximum(x @ params["w1"] + params["b1"], 0.0)
    return h @ params["w2"] + params["b2"]


if __name__ == "__main__":
    n_latents, n_cond, n_inputs = 16, 16, 64

    key = jax.random.PRNGKey(0)
    kz, kc, kp = jax.random.split(key, 3)
    params = init_decoder_params(kp, n_inputs, n_latents, n_cond)

    # Main check: B=512 -> two 256-row tiles (grid=2, exact split, both TCs busy).
    batch = 512
    z = jax.random.normal(kz, (batch, n_latents), jnp.float32)
    c = jax.random.normal(kc, (batch, n_cond), jnp.float32)

    out = decoder_forward(z, c, params)
    out = jax.block_until_ready(out)
    ref = decoder_reference(z, c, params)
    assert out.shape == (batch, n_inputs)
    # bf16 matmul operands with f32 accumulation -> loose tolerance.
    assert jnp.allclose(out, ref, atol=2e-2, rtol=2e-2), "mismatch vs reference (batch=512)"

    # Ragged-batch check: B=20 with 16-row tiles -> partial last block
    # (exercises the no-padding / masked-writeback path).
    batch2 = 20
    z2 = z[:batch2]
    c2 = c[:batch2]
    out2 = jax.block_until_ready(decoder_forward(z2, c2, params))
    ref2 = decoder_reference(z2, c2, params)
    assert out2.shape == (batch2, n_inputs)
    assert jnp.allclose(out2, ref2, atol=2e-2, rtol=2e-2), "mismatch vs reference (batch=20)"

    print("KERNEL_OK")
</pallas_src>

<mosaic_0001>
module attributes {stable_mosaic.version = 11 : i64} {
  func.func @decoder_kernel(%arg0: i32, %arg1: memref<256x16xf32, #tpu.memory_space<vmem>>, %arg2: memref<256x16xf32, #tpu.memory_space<vmem>>, %arg3: memref<32x512xbf16, #tpu.memory_space<vmem>>, %arg4: memref<1x512xf32, #tpu.memory_space<vmem>>, %arg5: memref<512x128xbf16, #tpu.memory_space<vmem>>, %arg6: memref<1x128xf32, #tpu.memory_space<vmem>>, %arg7: memref<256x128xf32, #tpu.memory_space<vmem>>, %arg8: memref<256x32xf32, #tpu.memory_space<vmem>>) attributes {dimension_semantics = [#tpu.dimension_semantics<parallel>], iteration_bounds = array<i64: 2>, scalar_prefetch = 0 : i64, scratch_operands = 1 : i64, tpu.core_type = #tpu.core_type<tc>, window_params = [{transform_indices = @transform_0, window_bounds = array<i64: 256, 16>}, {transform_indices = @transform_1, window_bounds = array<i64: 256, 16>}, {pipeline_mode = #tpu.pipeline_mode<synchronous>, transform_indices = @transform_2, window_bounds = array<i64: 32, 512>}, {pipeline_mode = #tpu.pipeline_mode<synchronous>, transform_indices = @transform_3, window_bounds = array<i64: 1, 512>}, {pipeline_mode = #tpu.pipeline_mode<synchronous>, transform_indices = @transform_4, window_bounds = array<i64: 512, 128>}, {pipeline_mode = #tpu.pipeline_mode<synchronous>, transform_indices = @transform_5, window_bounds = array<i64: 1, 128>}, {transform_indices = @transform_6, window_bounds = array<i64: 256, 128>}]} {
    %c0 = arith.constant 0 : index
    %c0_0 = arith.constant 0 : index
    %0 = vector.load %arg1[%c0, %c0_0] : memref<256x16xf32, #tpu.memory_space<vmem>>, vector<256x16xf32>
    %c0_1 = arith.constant 0 : index
    %c0_2 = arith.constant 0 : index
    %1 = vector.load %arg8[%c0_1, %c0_2] : memref<256x32xf32, #tpu.memory_space<vmem>>, vector<256x16xf32>
    tpu.vector_store %arg8[%c0_1, %c0_2], %0 {strides = array<i32>} : memref<256x32xf32, #tpu.memory_space<vmem>>, vector<256x16xf32>,
    %c0_3 = arith.constant 0 : index
    %c0_4 = arith.constant 0 : index
    %2 = vector.load %arg2[%c0_3, %c0_4] : memref<256x16xf32, #tpu.memory_space<vmem>>, vector<256x16xf32>
    %c0_5 = arith.constant 0 : index
    %c16 = arith.constant 16 : index
    %3 = vector.load %arg8[%c0_5, %c16] : memref<256x32xf32, #tpu.memory_space<vmem>>, vector<256x16xf32>
    tpu.vector_store %arg8[%c0_5, %c16], %2 {strides = array<i32>} : memref<256x32xf32, #tpu.memory_space<vmem>>, vector<256x16xf32>,
    %c0_6 = arith.constant 0 : index
    %c0_7 = arith.constant 0 : index
    %4 = vector.load %arg8[%c0_6, %c0_7] : memref<256x32xf32, #tpu.memory_space<vmem>>, vector<256x32xf32>
    %5 = arith.truncf %4 : vector<256x32xf32> to vector<256x32xbf16>
    %c0_8 = arith.constant 0 : index
    %c0_9 = arith.constant 0 : index
    %6 = vector.load %arg3[%c0_8, %c0_9] : memref<32x512xbf16, #tpu.memory_space<vmem>>, vector<32x512xbf16>
    %cst = arith.constant dense<0.000000e+00> : vector<256x512xf32>
    %7 = tpu.matmul %5, %6, %cst {dimension_numbers = #tpu.dot_dimension_numbers<[1], [0], [0], [1], [0, 0, 1, 1], [], []>} : vector<256x32xbf16>, vector<32x512xbf16>, vector<256x512xf32> -> vector<256x512xf32>
    %c0_10 = arith.constant 0 : index
    %c0_11 = arith.constant 0 : index
    %8 = vector.load %arg4[%c0_10, %c0_11] : memref<1x512xf32, #tpu.memory_space<vmem>>, vector<1x512xf32>
    %9 = vector.broadcast %8 : vector<1x512xf32> to vector<256x512xf32>
    %10 = arith.addf %7, %9 : vector<256x512xf32>
    %cst_12 = arith.constant 0.000000e+00 : f32
    %11 = vector.broadcast %cst_12 : f32 to vector<256x512xf32>
    %12 = arith.maximumf %10, %11 : vector<256x512xf32>
    %13 = arith.truncf %12 : vector<256x512xf32> to vector<256x512xbf16>
    %c0_13 = arith.constant 0 : index
    %c0_14 = arith.constant 0 : index
    %14 = vector.load %arg5[%c0_13, %c0_14] : memref<512x128xbf16, #tpu.memory_space<vmem>>, vector<512x128xbf16>
    %cst_15 = arith.constant dense<0.000000e+00> : vector<256x128xf32>
    %15 = tpu.matmul %13, %14, %cst_15 {dimension_numbers = #tpu.dot_dimension_numbers<[1], [0], [0], [1], [0, 0, 1, 1], [], []>} : vector<256x512xbf16>, vector<512x128xbf16>, vector<256x128xf32> -> vector<256x128xf32>
    %c0_16 = arith.constant 0 : index
    %c0_17 = arith.constant 0 : index
    %16 = vector.load %arg6[%c0_16, %c0_17] : memref<1x128xf32, #tpu.memory_space<vmem>>, vector<1x128xf32>
    %17 = vector.broadcast %16 : vector<1x128xf32> to vector<256x128xf32>
    %18 = arith.addf %15, %17 : vector<256x128xf32>
    %c0_18 = arith.constant 0 : index
    %c0_19 = arith.constant 0 : index
    %19 = vector.load %arg7[%c0_18, %c0_19] : memref<256x128xf32, #tpu.memory_space<vmem>>, vector<256x128xf32>
    tpu.vector_store %arg7[%c0_18, %c0_19], %18 {strides = array<i32>} : memref<256x128xf32, #tpu.memory_space<vmem>>, vector<256x128xf32>,
    return
  }
  func.func @transform_0(%arg0: i32) -> (i32, i32) {
    %c0_i32 = arith.constant 0 : i32
    %c0_i32_0 = arith.constant 0 : i32
    return %arg0, %c0_i32 : i32, i32
  }
  func.func @transform_1(%arg0: i32) -> (i32, i32) {
    %c0_i32 = arith.constant 0 : i32
    %c0_i32_0 = arith.constant 0 : i32
    return %arg0, %c0_i32 : i32, i32
  }
  func.func @transform_2(%arg0: i32) -> (i32, i32) {
    %c0_i32 = arith.constant 0 : i32
    %c0_i32_0 = arith.constant 0 : i32
    %c0_i32_1 = arith.constant 0 : i32
    return %c0_i32, %c0_i32_0 : i32, i32
  }
  func.func @transform_3(%arg0: i32) -> (i32, i32) {
    %c0_i32 = arith.constant 0 : i32
    %c0_i32_0 = arith.constant 0 : i32
    %c0_i32_1 = arith.constant 0 : i32
    return %c0_i32, %c0_i32_0 : i32, i32
  }
  func.func @transform_4(%arg0: i32) -> (i32, i32) {
    %c0_i32 = arith.constant 0 : i32
    %c0_i32_0 = arith.constant 0 : i32
    %c0_i32_1 = arith.constant 0 : i32
    return %c0_i32, %c0_i32_0 : i32, i32
  }
  func.func @transform_5(%arg0: i32) -> (i32, i32) {
    %c0_i32 = arith.constant 0 : i32
    %c0_i32_0 = arith.constant 0 : i32
    %c0_i32_1 = arith.constant 0 : i32
    return %c0_i32, %c0_i32_0 : i32, i32
  }
  func.func @transform_6(%arg0: i32) -> (i32, i32) {
    %c0_i32 = arith.constant 0 : i32
    %c0_i32_0 = arith.constant 0 : i32
    return %arg0, %c0_i32 : i32, i32
  }
}

</mosaic_0001>

<llo_original>
// kernel: tpu_custom_call.1
$region0: #{tpu_custom_call.1}
  #allocation0 [shape = 'u32[]', space=smem, size = 0x4, offset = 0x4, fixed_abs, tag = 'smem constant byte address 0x4 - core index']
  #allocation1 [shape = 'u32[144,128]{1,0:T(1,128)}', space=vmem, size = 0x12000, scoped, tag = 'internal scratch']
  #allocation2 [shape = 'f32[256,32]{1,0:T(8,128)}', space=vmem, size = 0x20000, scoped, tag = 'scratch operand']
  %s0 = inlined_call_operand.vmem [shape: f32[512,16], index: 0, kind: input, shape index: {}]
  %s1 = inlined_call_operand.vmem [shape: f32[512,16], index: 1, kind: input, shape index: {}]
  %s2 = inlined_call_operand.vmem [shape: bf16[32,512], index: 2, kind: input, shape index: {}]
  %s3 = inlined_call_operand.vmem [shape: f32[1,512], index: 3, kind: input, shape index: {}]
  %s4 = inlined_call_operand.vmem [shape: bf16[512,128], index: 4, kind: input, shape index: {}]
  %s5 = inlined_call_operand.vmem [shape: f32[1,128], index: 5, kind: input, shape index: {}]
  %s6 = inlined_call_operand.hbm [shape: f32[512,128], index: 6, kind: output, shape index: {}]
  %s7 = sld [smem:[#allocation0]]
  $region57: #{tpu_custom_call.1} parent=0
    _
  %s9 = ssub.s32 1, %s7
  %s10 = scalar_select 0, %s9, %s7
  $region1: #{tpu_custom_call.1} parent=0
    #allocation3 [shape = 'u8[262144]{0}', space=vmem, size = 0x40000, scoped, tag = 'output window, operand 0']
    #allocation4 [shape = 's32[2]{0}', space=sflag, size = 0x8, scoped, tag = 'scoped memory for tpu_custom_call.1']
    %11 = vsyncpa [#allocation4], 0
    %s12 = scalar_lea.sflag [#allocation4], 1
    %13 = vsyncpa %s12, 0
    loop: start=0, step=1, limit=4
    $region2: #{tpu_custom_call.1} parent=1 // loop_pre_header
      _
    $region3: #{tpu_custom_call.1} parent=1 // loop_header
      %s15 = sphi 0, %s19
      %p16 = scmp.ge.s32.totalorder %s15, 4
      %s25 = sphi 0, %s27
      %s28 = sphi 0, %s25
      %s29 = sphi 0, %s28
      %s45 = sphi 0, %s29
      %s51 = sphi 0, %s53
      %s54 = sphi 0, %s51
      %s55 = sphi 0, %s54
      %s71 = sphi 0, %s55
      %s75 = sphi 0, %s75
      %s77 = sphi 0, %s75
      %s78 = sphi 0, %s77
      %s92 = sphi 0, %s78
      %s96 = sphi 0, %s96
      %s98 = sphi 0, %s96
      %s99 = sphi 0, %s98
      %s113 = sphi 0, %s99
      %s117 = sphi 0, %s117
      %s119 = sphi 0, %s117
      %s120 = sphi 0, %s119
      %s134 = sphi 0, %s120
      %s138 = sphi 0, %s138
      %s140 = sphi 0, %s138
      %s141 = sphi 0, %s140
      %s155 = sphi 0, %s141
      %s161 = sphi 0, %s163
      %s164 = sphi 0, %s161
      %s165 = sphi 0, %s164
      %s181 = sphi 0, %s165
    $region4: #{tpu_custom_call.1} parent=1 // loop_header_branch
      %18 = sbr.rel (%p16) target = $region8
    $region5: #{tpu_custom_call.1} parent=1 // loop_body
      %s20 = ssub.s32 %s15, 1
      %s21 = ssub.s32 %s15, 2
      %s22 = sadd.s32 %s15, 1
      %s23 = ssub.s32 %s15, %s22
      %p24 = scmp.eq.s32.totalorder %s23, 0
      %s26 = sadd.s32 %s25, 1
      %s27 = scalar_select %p24, %s25, %s26
      %p30 = pneg %p24
      %p31 = scmp.eq.s32.totalorder %s15, 1
      %p32 = por %p30, %p31
      %p33 = scmp.ne.s32.totalorder %s25, %s28
      %p34 = scmp.eq.s32.totalorder %s15, 0
      %p35 = por %p33, %p34
      %p36 = scmp.ne.s32.totalorder %s25, %s28
      %p37 = scmp.eq.s32.totalorder %s20, 1
      %p38 = por %p36, %p37
      %p39 = scmp.ne.s32.totalorder %s28, %s29
      %p40 = scmp.eq.s32.totalorder %s20, 0
      %p41 = por %p39, %p40
      %p42 = scmp.ne.s32.totalorder %s28, %s29
      %p43 = scmp.eq.s32.totalorder %s21, 1
      %p44 = por %p42, %p43
      %p46 = scmp.ne.s32.totalorder %s29, %s45
      %p47 = scmp.eq.s32.totalorder %s21, 0
      %p48 = por %p46, %p47
      %s49 = ssub.s32 %s15, %s22
      %p50 = scmp.eq.s32.totalorder %s49, 0
      %s52 = sadd.s32 %s51, 1
      %s53 = scalar_select %p50, %s51, %s52
      %p56 = pneg %p50
      %p57 = scmp.eq.s32.totalorder %s15, 1
      %p58 = por %p56, %p57
      %p59 = scmp.ne.s32.totalorder %s51, %s54
      %p60 = scmp.eq.s32.totalorder %s15, 0
      %p61 = por %p59, %p60
      %p62 = scmp.ne.s32.totalorder %s51, %s54
      %p63 = scmp.eq.s32.totalorder %s20, 1
      %p64 = por %p62, %p63
      %p65 = scmp.ne.s32.totalorder %s54, %s55
      %p66 = scmp.eq.s32.totalorder %s20, 0
      %p67 = por %p65, %p66
      %p68 = scmp.ne.s32.totalorder %s54, %s55
      %p69 = scmp.eq.s32.totalorder %s21, 1
      %p70 = por %p68, %p69
      %p72 = scmp.ne.s32.totalorder %s55, %s71
      %p73 = scmp.eq.s32.totalorder %s21, 0
      %p74 = por %p72, %p73
      %s76 = sadd.s32 %s75, 1
      %p79 = scmp.eq.s32.totalorder %s15, 1
      %p80 = scmp.ne.s32.totalorder %s75, %s77
      %p81 = scmp.eq.s32.totalorder %s15, 0
      %p82 = por %p80, %p81
      %p83 = scmp.ne.s32.totalorder %s75, %s77
      %p84 = scmp.eq.s32.totalorder %s20, 1
      %p85 = por %p83, %p84
      %p86 = scmp.ne.s32.totalorder %s77, %s78
      %p87 = scmp.eq.s32.totalorder %s20, 0
      %p88 = por %p86, %p87
      %p89 = scmp.ne.s32.totalorder %s77, %s78
      %p90 = scmp.eq.s32.totalorder %s21, 1
      %p91 = por %p89, %p90
      %p93 = scmp.ne.s32.totalorder %s78, %s92
      %p94 = scmp.eq.s32.totalorder %s21, 0
      %p95 = por %p93, %p94
      %s97 = sadd.s32 %s96, 1
      %p100 = scmp.eq.s32.totalorder %s15, 1
      %p101 = scmp.ne.s32.totalorder %s96, %s98
      %p102 = scmp.eq.s32.totalorder %s15, 0
      %p103 = por %p101, %p102
      %p104 = scmp.ne.s32.totalorder %s96, %s98
      %p105 = scmp.eq.s32.totalorder %s20, 1
      %p106 = por %p104, %p105
      %p107 = scmp.ne.s32.totalorder %s98, %s99
      %p108 = scmp.eq.s32.totalorder %s20, 0
      %p109 = por %p107, %p108
      %p110 = scmp.ne.s32.totalorder %s98, %s99
      %p111 = scmp.eq.s32.totalorder %s21, 1
      %p112 = por %p110, %p111
      %p114 = scmp.ne.s32.totalorder %s99, %s113
      %p115 = scmp.eq.s32.totalorder %s21, 0
      %p116 = por %p114, %p115
      %s118 = sadd.s32 %s117, 1
      %p121 = scmp.eq.s32.totalorder %s15, 1
      %p122 = scmp.ne.s32.totalorder %s117, %s119
      %p123 = scmp.eq.s32.totalorder %s15, 0
      %p124 = por %p122, %p123
      %p125 = scmp.ne.s32.totalorder %s117, %s119
      %p126 = scmp.eq.s32.totalorder %s20, 1
      %p127 = por %p125, %p126
      %p128 = scmp.ne.s32.totalorder %s119, %s120
      %p129 = scmp.eq.s32.totalorder %s20, 0
      %p130 = por %p128, %p129
      %p131 = scmp.ne.s32.totalorder %s119, %s120
      %p132 = scmp.eq.s32.totalorder %s21, 1
      %p133 = por %p131, %p132
      %p135 = scmp.ne.s32.totalorder %s120, %s134
      %p136 = scmp.eq.s32.totalorder %s21, 0
      %p137 = por %p135, %p136
      %s139 = sadd.s32 %s138, 1
      %p142 = scmp.eq.s32.totalorder %s15, 1
      %p143 = scmp.ne.s32.totalorder %s138, %s140
      %p144 = scmp.eq.s32.totalorder %s15, 0
      %p145 = por %p143, %p144
      %p146 = scmp.ne.s32.totalorder %s138, %s140
      %p147 = scmp.eq.s32.totalorder %s20, 1
      %p148 = por %p146, %p147
      %p149 = scmp.ne.s32.totalorder %s140, %s141
      %p150 = scmp.eq.s32.totalorder %s20, 0
      %p151 = por %p149, %p150
      %p152 = scmp.ne.s32.totalorder %s140, %s141
      %p153 = scmp.eq.s32.totalorder %s21, 1
      %p154 = por %p152, %p153
      %p156 = scmp.ne.s32.totalorder %s141, %s155
      %p157 = scmp.eq.s32.totalorder %s21, 0
      %p158 = por %p156, %p157
      %s159 = ssub.s32 %s15, %s22
      %p160 = scmp.eq.s32.totalorder %s159, 0
      %s162 = sadd.s32 %s161, 1
      %s163 = scalar_select %p160, %s161, %s162
      %p166 = pneg %p160
      %p167 = scmp.eq.s32.totalorder %s15, 1
      %p168 = por %p166, %p167
      %p169 = scmp.ne.s32.totalorder %s161, %s164
      %p170 = scmp.eq.s32.totalorder %s15, 0
      %p171 = por %p169, %p170
      %p172 = scmp.ne.s32.totalorder %s161, %s164
      %p173 = scmp.eq.s32.totalorder %s20, 1
      %p174 = por %p172, %p173
      %p175 = scmp.ne.s32.totalorder %s164, %s165
      %p176 = scmp.eq.s32.totalorder %s20, 0
      %p177 = por %p175, %p176
      %p178 = scmp.ne.s32.totalorder %s164, %s165
      %p179 = scmp.eq.s32.totalorder %s21, 1
      %p180 = por %p178, %p179
      %p182 = scmp.ne.s32.totalorder %s165, %s181
      %p183 = scmp.eq.s32.totalorder %s21, 0
      %p184 = por %p182, %p183
      %p185 = scmp.le.s32.totalorder 1, %s15
      %p186 = scmp.lt.s32.totalorder %s15, 3
      %p187 = pnand %p185, %p186
      %p188 = pneg %p187
      // Predicated region
      $region9: #{tpu_custom_call.1} parent=5 // pred_check
        _
      $region10: #{tpu_custom_call.1} parent=5 // pred_check_branch
        %190 = sbr.rel (%p187) target = $region12
      $region11: #{tpu_custom_call.1} parent=5 // pred_region
        %s191 = ssub.s32 %s15, 1
        // Predicated region
        $region13: #{tpu_custom_call.1} parent=11 // pred_check
          %p192 = pneg %p88
        $region14: #{tpu_custom_call.1} parent=11 // pred_check_branch
          %194 = sbr.rel (%p192) target = $region16
        $region15: #{tpu_custom_call.1} parent=11 // pred_region
          _
        $region16: #{tpu_custom_call.1} parent=11 // pred_fallthru
          _
        // Predicated region
        $region17: #{tpu_custom_call.1} parent=11 // pred_check
          %p195 = pneg %p109
        $region18: #{tpu_custom_call.1} parent=11 // pred_check_branch
          %197 = sbr.rel (%p195) target = $region20
        $region19: #{tpu_custom_call.1} parent=11 // pred_region
          _
        $region20: #{tpu_custom_call.1} parent=11 // pred_fallthru
          _
        // Predicated region
        $region21: #{tpu_custom_call.1} parent=11 // pred_check
          %p198 = pneg %p130
        $region22: #{tpu_custom_call.1} parent=11 // pred_check_branch
          %200 = sbr.rel (%p198) target = $region24
        $region23: #{tpu_custom_call.1} parent=11 // pred_region
          _
        $region24: #{tpu_custom_call.1} parent=11 // pred_fallthru
          _
        // Predicated region
        $region25: #{tpu_custom_call.1} parent=11 // pred_check
          %p201 = pneg %p151
        $region26: #{tpu_custom_call.1} parent=11 // pred_check_branch
          %203 = sbr.rel (%p201) target = $region28
        $region27: #{tpu_custom_call.1} parent=11 // pred_region
          _
        $region28: #{tpu_custom_call.1} parent=11 // pred_fallthru
          _
      $region12: #{tpu_custom_call.1} parent=5 // pred_fallthru
        _
      %p204 = scmp.lt.s32.totalorder %s15, 2
      // Predicated region
      $region29: #{tpu_custom_call.1} parent=5 // pred_check
        %p205 = pneg %p204
      $region30: #{tpu_custom_call.1} parent=5 // pred_check_branch
        %207 = sbr.rel (%p205) target = $region32
      $region31: #{tpu_custom_call.1} parent=5 // pred_region
        // Predicated region
        $region33: #{tpu_custom_call.1} parent=31 // pred_check
          %p208 = pneg %p35
        $region34: #{tpu_custom_call.1} parent=31 // pred_check_branch
          %210 = sbr.rel (%p208) target = $region36
        $region35: #{tpu_custom_call.1} parent=31 // pred_region
          %s211 = smul.u32 32, %s15
          %p212 = scmp.lt.s32.totalorder %s211, 63
          %s213 = scalar_select %p212, %s211, 63
          %s214 = smul.addr %s213, 8
          %s215 = scalar_lea.vmem %s0, %s214
          %s216 = smul.u32 32, %s15
        $region36: #{tpu_custom_call.1} parent=31 // pred_fallthru
          _
        // Predicated region
        $region37: #{tpu_custom_call.1} parent=31 // pred_check
          %p217 = pneg %p61
        $region38: #{tpu_custom_call.1} parent=31 // pred_check_branch
          %219 = sbr.rel (%p217) target = $region40
        $region39: #{tpu_custom_call.1} parent=31 // pred_region
          %s220 = smul.u32 32, %s15
          %p221 = scmp.lt.s32.totalorder %s220, 63
          %s222 = scalar_select %p221, %s220, 63
          %s223 = smul.addr %s222, 8
          %s224 = scalar_lea.vmem %s1, %s223
          %s225 = smul.u32 32, %s15
        $region40: #{tpu_custom_call.1} parent=31 // pred_fallthru
          _
      $region32: #{tpu_custom_call.1} parent=5 // pred_fallthru
        _
      %p226 = scmp.le.s32.totalorder 1, %s15
      %p227 = scmp.lt.s32.totalorder %s15, 3
      %p228 = pnand %p226, %p227
      %p229 = pneg %p228
      // Predicated region
      $region41: #{tpu_custom_call.1} parent=5 // pred_check
        _
      $region42: #{tpu_custom_call.1} parent=5 // pred_check_branch
        %231 = sbr.rel (%p228) target = $region44
      $region43: #{tpu_custom_call.1} parent=5 // pred_region
        %s232 = ssub.s32 %s15, 1
        %s233 = smul.u32 32, %s20
        %p234 = scmp.lt.s32.totalorder %s233, 63
        %s235 = scalar_select %p234, %s233, 63
        %s236 = smul.addr %s235, 8
        %s237 = scalar_lea.vmem %s0, %s236
        %p238 = pneg %p41
        %p239 = pneg %p38
        %s240 = smul.u32 32, %s20
        %p241 = scmp.lt.s32.totalorder %s240, 63
        %s242 = scalar_select %p241, %s240, 63
        %s243 = smul.addr %s242, 8
        %s244 = scalar_lea.vmem %s1, %s243
        %p245 = pneg %p67
        %p246 = pneg %p64
        %p247 = pneg %p88
        %p248 = pneg %p85
        %p249 = pneg %p109
        %p250 = pneg %p106
        %p251 = pneg %p130
        %p252 = pneg %p127
        %p253 = pneg %p151
        %p254 = pneg %p148
        %p255 = pneg %p177
        %p256 = pneg %p174
        %s257 = sand.u32 %s164, 1
        %s258 = scalar_lea.sflag [#allocation4], %s257
        %s259 = sand.u32 %s164, 1
        %s260 = smul.addr %s259, 256
        %s261 = scalar_lea.vmem [#allocation3], %s260
        %s262 = smul.u32 32, %s20
        %p263 = scmp.lt.s32.totalorder %s262, 63
        %s264 = scalar_select %p263, %s262, 63
        %s265 = smul.addr %s264, 8
        %s266 = scalar_lea.vmem %s0, %s265
        %s267 = smul.u32 32, %s20
        %s268 = smul.u32 32, %s20
        %p269 = scmp.lt.s32.totalorder %s268, 63
        %s270 = scalar_select %p269, %s268, 63
        %s271 = smul.addr %s270, 8
        %s272 = scalar_lea.vmem %s1, %s271
        %s273 = smul.u32 32, %s20
        %s274 = smul.u32 32, %s20
        %v276 = vld [vmem:[%s266] sm:$0xff]
        %v277 = vld [vmem:[%s266 + $0x8] sm:$0xff]
        %v278 = vld [vmem:[%s266 + $0x10] sm:$0xff]
        %v279 = vld [vmem:[%s266 + $0x18] sm:$0xff]
        %v280 = vld [vmem:[%s266 + $0x20] sm:$0xff]
        %v281 = vld [vmem:[%s266 + $0x28] sm:$0xff]
        %v282 = vld [vmem:[%s266 + $0x30] sm:$0xff]
        %v283 = vld [vmem:[%s266 + $0x38] sm:$0xff]
        %v284 = vld [vmem:[%s266 + $0x40] sm:$0xff]
        %v285 = vld [vmem:[%s266 + $0x48] sm:$0xff]
        %v286 = vld [vmem:[%s266 + $0x50] sm:$0xff]
        %v287 = vld [vmem:[%s266 + $0x58] sm:$0xff]
        %v288 = vld [vmem:[%s266 + $0x60] sm:$0xff]
        %v289 = vld [vmem:[%s266 + $0x68] sm:$0xff]
        %v290 = vld [vmem:[%s266 + $0x70] sm:$0xff]
        %v291 = vld [vmem:[%s266 + $0x78] sm:$0xff]
        %v292 = vld [vmem:[%s266 + $0x80] sm:$0xff]
        %v293 = vld [vmem:[%s266 + $0x88] sm:$0xff]
        %v294 = vld [vmem:[%s266 + $0x90] sm:$0xff]
        %v295 = vld [vmem:[%s266 + $0x98] sm:$0xff]
        %v296 = vld [vmem:[%s266 + $0xa0] sm:$0xff]
        %v297 = vld [vmem:[%s266 + $0xa8] sm:$0xff]
        %v298 = vld [vmem:[%s266 + $0xb0] sm:$0xff]
        %v299 = vld [vmem:[%s266 + $0xb8] sm:$0xff]
        %v300 = vld [vmem:[%s266 + $0xc0] sm:$0xff]
        %v301 = vld [vmem:[%s266 + $0xc8] sm:$0xff]
        %v302 = vld [vmem:[%s266 + $0xd0] sm:$0xff]
        %v303 = vld [vmem:[%s266 + $0xd8] sm:$0xff]
        %v304 = vld [vmem:[%s266 + $0xe0] sm:$0xff]
        %v305 = vld [vmem:[%s266 + $0xe8] sm:$0xff]
        %v306 = vld [vmem:[%s266 + $0xf0] sm:$0xff]
        %v307 = vld [vmem:[%s266 + $0xf8] sm:$0xff]
        %vm308 = vcmask 130048
        %309 = vst.msk [vmem:[#allocation2] sm:$0xff] %vm308, %v276
        %310 = vst.msk [vmem:[#allocation2 + $0x8] sm:$0xff] %vm308, %v277
        %311 = vst.msk [vmem:[#allocation2 + $0x10] sm:$0xff] %vm308, %v278
        %312 = vst.msk [vmem:[#allocation2 + $0x18] sm:$0xff] %vm308, %v279
        %313 = vst.msk [vmem:[#allocation2 + $0x20] sm:$0xff] %vm308, %v280
        %314 = vst.msk [vmem:[#allocation2 + $0x28] sm:$0xff] %vm308, %v281
        %315 = vst.msk [vmem:[#allocation2 + $0x30] sm:$0xff] %vm308, %v282
        %316 = vst.msk [vmem:[#allocation2 + $0x38] sm:$0xff] %vm308, %v283
        %317 = vst.msk [vmem:[#allocation2 + $0x40] sm:$0xff] %vm308, %v284
        %318 = vst.msk [vmem:[#allocation2 + $0x48] sm:$0xff] %vm308, %v285
        %319 = vst.msk [vmem:[#allocation2 + $0x50] sm:$0xff] %vm308, %v286
        %320 = vst.msk [vmem:[#allocation2 + $0x58] sm:$0xff] %vm308, %v287
        %321 = vst.msk [vmem:[#allocation2 + $0x60] sm:$0xff] %vm308, %v288
        %322 = vst.msk [vmem:[#allocation2 + $0x68] sm:$0xff] %vm308, %v289
        %323 = vst.msk [vmem:[#allocation2 + $0x70] sm:$0xff] %vm308, %v290
        %324 = vst.msk [vmem:[#allocation2 + $0x78] sm:$0xff] %vm308, %v291
        %325 = vst.msk [vmem:[#allocation2 + $0x80] sm:$0xff] %vm308, %v292
        %326 = vst.msk [vmem:[#allocation2 + $0x88] sm:$0xff] %vm308, %v293
        %327 = vst.msk [vmem:[#allocation2 + $0x90] sm:$0xff] %vm308, %v294
        %328 = vst.msk [vmem:[#allocation2 + $0x98] sm:$0xff] %vm308, %v295
        %329 = vst.msk [vmem:[#allocation2 + $0xa0] sm:$0xff] %vm308, %v296
        %330 = vst.msk [vmem:[#allocation2 + $0xa8] sm:$0xff] %vm308, %v297
        %331 = vst.msk [vmem:[#allocation2 + $0xb0] sm:$0xff] %vm308, %v298
        %332 = vst.msk [vmem:[#allocation2 + $0xb8] sm:$0xff] %vm308, %v299
        %333 = vst.msk [vmem:[#allocation2 + $0xc0] sm:$0xff] %vm308, %v300
        %334 = vst.msk [vmem:[#allocation2 + $0xc8] sm:$0xff] %vm308, %v301
        %335 = vst.msk [vmem:[#allocation2 + $0xd0] sm:$0xff] %vm308, %v302
        %336 = vst.msk [vmem:[#allocation2 + $0xd8] sm:$0xff] %vm308, %v303
        %337 = vst.msk [vmem:[#allocation2 + $0xe0] sm:$0xff] %vm308, %v304
        %338 = vst.msk [vmem:[#allocation2 + $0xe8] sm:$0xff] %vm308, %v305
        %339 = vst.msk [vmem:[#allocation2 + $0xf0] sm:$0xff] %vm308, %v306
        %340 = vst.msk [vmem:[#allocation2 + $0xf8] sm:$0xff] %vm308, %v307
        %v341 = vld [vmem:[%s272] sm:$0xff]
        %v342 = vld [vmem:[%s272 + $0x8] sm:$0xff]
        %v343 = vld [vmem:[%s272 + $0x10] sm:$0xff]
        %v344 = vld [vmem:[%s272 + $0x18] sm:$0xff]
        %v345 = vld [vmem:[%s272 + $0x20] sm:$0xff]
        %v346 = vld [vmem:[%s272 + $0x28] sm:$0xff]
        %v347 = vld [vmem:[%s272 + $0x30] sm:$0xff]
        %v348 = vld [vmem:[%s272 + $0x38] sm:$0xff]
        %v349 = vld [vmem:[%s272 + $0x40] sm:$0xff]
        %v350 = vld [vmem:[%s272 + $0x48] sm:$0xff]
        %v351 = vld [vmem:[%s272 + $0x50] sm:$0xff]
        %v352 = vld [vmem:[%s272 + $0x58] sm:$0xff]
        %v353 = vld [vmem:[%s272 + $0x60] sm:$0xff]
        %v354 = vld [vmem:[%s272 + $0x68] sm:$0xff]
        %v355 = vld [vmem:[%s272 + $0x70] sm:$0xff]
        %v356 = vld [vmem:[%s272 + $0x78] sm:$0xff]
        %v357 = vld [vmem:[%s272 + $0x80] sm:$0xff]
        %v358 = vld [vmem:[%s272 + $0x88] sm:$0xff]
        %v359 = vld [vmem:[%s272 + $0x90] sm:$0xff]
        %v360 = vld [vmem:[%s272 + $0x98] sm:$0xff]
        %v361 = vld [vmem:[%s272 + $0xa0] sm:$0xff]
        %v362 = vld [vmem:[%s272 + $0xa8] sm:$0xff]
        %v363 = vld [vmem:[%s272 + $0xb0] sm:$0xff]
        %v364 = vld [vmem:[%s272 + $0xb8] sm:$0xff]
        %v365 = vld [vmem:[%s272 + $0xc0] sm:$0xff]
        %v366 = vld [vmem:[%s272 + $0xc8] sm:$0xff]
        %v367 = vld [vmem:[%s272 + $0xd0] sm:$0xff]
        %v368 = vld [vmem:[%s272 + $0xd8] sm:$0xff]
        %v369 = vld [vmem:[%s272 + $0xe0] sm:$0xff]
        %v370 = vld [vmem:[%s272 + $0xe8] sm:$0xff]
        %v371 = vld [vmem:[%s272 + $0xf0] sm:$0xff]
        %v372 = vld [vmem:[%s272 + $0xf8] sm:$0xff]
        %405 = vrot.lane.b32.xlu0 %v341, 16
        %v406 = vpop.permute.xlu0 %405
        %407 = vrot.lane.b32.xlu0 %v342, 16
        %v408 = vpop.permute.xlu0 %407
        %409 = vrot.lane.b32.xlu0 %v343, 16
        %v410 = vpop.permute.xlu0 %409
        %411 = vrot.lane.b32.xlu0 %v344, 16
        %v412 = vpop.permute.xlu0 %411
        %413 = vrot.lane.b32.xlu0 %v345, 16
        %v414 = vpop.permute.xlu0 %413
        %415 = vrot.lane.b32.xlu0 %v346, 16
        %v416 = vpop.permute.xlu0 %415
        %417 = vrot.lane.b32.xlu0 %v347, 16
        %v418 = vpop.permute.xlu0 %417
        %419 = vrot.lane.b32.xlu0 %v348, 16
        %v420 = vpop.permute.xlu0 %419
        %421 = vrot.lane.b32.xlu0 %v349, 16
        %v422 = vpop.permute.xlu0 %421
        %423 = vrot.lane.b32.xlu0 %v350, 16
        %v424 = vpop.permute.xlu0 %423
        %425 = vrot.lane.b32.xlu0 %v351, 16
        %v426 = vpop.permute.xlu0 %425
        %427 = vrot.lane.b32.xlu0 %v352, 16
        %v428 = vpop.permute.xlu0 %427
        %429 = vrot.lane.b32.xlu0 %v353, 16
        %v430 = vpop.permute.xlu0 %429
        %431 = vrot.lane.b32.xlu0 %v354, 16
        %v432 = vpop.permute.xlu0 %431
        %433 = vrot.lane.b32.xlu0 %v355, 16
        %v434 = vpop.permute.xlu0 %433
        %435 = vrot.lane.b32.xlu0 %v356, 16
        %v436 = vpop.permute.xlu0 %435
        %437 = vrot.lane.b32.xlu0 %v357, 16
        %v438 = vpop.permute.xlu0 %437
        %439 = vrot.lane.b32.xlu0 %v358, 16
        %v440 = vpop.permute.xlu0 %439
        %441 = vrot.lane.b32.xlu0 %v359, 16
        %v442 = vpop.permute.xlu0 %441
        %443 = vrot.lane.b32.xlu0 %v360, 16
        %v444 = vpop.permute.xlu0 %443
        %445 = vrot.lane.b32.xlu0 %v361, 16
        %v446 = vpop.permute.xlu0 %445
        %447 = vrot.lane.b32.xlu0 %v362, 16
        %v448 = vpop.permute.xlu0 %447
        %449 = vrot.lane.b32.xlu0 %v363, 16
        %v450 = vpop.permute.xlu0 %449
        %451 = vrot.lane.b32.xlu0 %v364, 16
        %v452 = vpop.permute.xlu0 %451
        %453 = vrot.lane.b32.xlu0 %v365, 16
        %v454 = vpop.permute.xlu0 %453
        %455 = vrot.lane.b32.xlu0 %v366, 16
        %v456 = vpop.permute.xlu0 %455
        %457 = vrot.lane.b32.xlu0 %v367, 16
        %v458 = vpop.permute.xlu0 %457
        %459 = vrot.lane.b32.xlu0 %v368, 16
        %v460 = vpop.permute.xlu0 %459
        %461 = vrot.lane.b32.xlu0 %v369, 16
        %v462 = vpop.permute.xlu0 %461
        %463 = vrot.lane.b32.xlu0 %v370, 16
        %v464 = vpop.permute.xlu0 %463
        %465 = vrot.lane.b32.xlu0 %v371, 16
        %v466 = vpop.permute.xlu0 %465
        %467 = vrot.lane.b32.xlu0 %v372, 16
        %v468 = vpop.permute.xlu0 %467
        %vm501 = vcmask 261248
        %502 = vst.msk [vmem:[#allocation2] sm:$0xff] %vm501, %v406
        %503 = vst.msk [vmem:[#allocation2 + $0x8] sm:$0xff] %vm501, %v408
        %504 = vst.msk [vmem:[#allocation2 + $0x10] sm:$0xff] %vm501, %v410
        %505 = vst.msk [vmem:[#allocation2 + $0x18] sm:$0xff] %vm501, %v412
        %506 = vst.msk [vmem:[#allocation2 + $0x20] sm:$0xff] %vm501, %v414
        %507 = vst.msk [vmem:[#allocation2 + $0x28] sm:$0xff] %vm501, %v416
        %508 = vst.msk [vmem:[#allocation2 + $0x30] sm:$0xff] %vm501, %v418
        %509 = vst.msk [vmem:[#allocation2 + $0x38] sm:$0xff] %vm501, %v420
        %510 = vst.msk [vmem:[#allocation2 + $0x40] sm:$0xff] %vm501, %v422
        %511 = vst.msk [vmem:[#allocation2 + $0x48] sm:$0xff] %vm501, %v424
        %512 = vst.msk [vmem:[#allocation2 + $0x50] sm:$0xff] %vm501, %v426
        %513 = vst.msk [vmem:[#allocation2 + $0x58] sm:$0xff] %vm501, %v428
        %514 = vst.msk [vmem:[#allocation2 + $0x60] sm:$0xff] %vm501, %v430
        %515 = vst.msk [vmem:[#allocation2 + $0x68] sm:$0xff] %vm501, %v432
        %516 = vst.msk [vmem:[#allocation2 + $0x70] sm:$0xff] %vm501, %v434
        %517 = vst.msk [vmem:[#allocation2 + $0x78] sm:$0xff] %vm501, %v436
        %518 = vst.msk [vmem:[#allocation2 + $0x80] sm:$0xff] %vm501, %v438
        %519 = vst.msk [vmem:[#allocation2 + $0x88] sm:$0xff] %vm501, %v440
        %520 = vst.msk [vmem:[#allocation2 + $0x90] sm:$0xff] %vm501, %v442
        %521 = vst.msk [vmem:[#allocation2 + $0x98] sm:$0xff] %vm501, %v444
        %522 = vst.msk [vmem:[#allocation2 + $0xa0] sm:$0xff] %vm501, %v446
        %523 = vst.msk [vmem:[#allocation2 + $0xa8] sm:$0xff] %vm501, %v448
        %524 = vst.msk [vmem:[#allocation2 + $0xb0] sm:$0xff] %vm501, %v450
        %525 = vst.msk [vmem:[#allocation2 + $0xb8] sm:$0xff] %vm501, %v452
        %526 = vst.msk [vmem:[#allocation2 + $0xc0] sm:$0xff] %vm501, %v454
        %527 = vst.msk [vmem:[#allocation2 + $0xc8] sm:$0xff] %vm501, %v456
        %528 = vst.msk [vmem:[#allocation2 + $0xd0] sm:$0xff] %vm501, %v458
        %529 = vst.msk [vmem:[#allocation2 + $0xd8] sm:$0xff] %vm501, %v460
        %530 = vst.msk [vmem:[#allocation2 + $0xe0] sm:$0xff] %vm501, %v462
        %531 = vst.msk [vmem:[#allocation2 + $0xe8] sm:$0xff] %vm501, %v464
        %532 = vst.msk [vmem:[#allocation2 + $0xf0] sm:$0xff] %vm501, %v466
        %533 = vst.msk [vmem:[#allocation2 + $0xf8] sm:$0xff] %vm501, %v468
        %v534 = vld [vmem:[#allocation2] sm:$0xff]
        %v535 = vld [vmem:[#allocation2 + $0x8] sm:$0xff]
        %v536 = vld [vmem:[#allocation2 + $0x10] sm:$0xff]
        %v537 = vld [vmem:[#allocation2 + $0x18] sm:$0xff]
        %v538 = vld [vmem:[#allocation2 + $0x20] sm:$0xff]
        %v539 = vld [vmem:[#allocation2 + $0x28] sm:$0xff]
        %v540 = vld [vmem:[#allocation2 + $0x30] sm:$0xff]
        %v541 = vld [vmem:[#allocation2 + $0x38] sm:$0xff]
        %v542 = vld [vmem:[#allocation2 + $0x40] sm:$0xff]
        %v543 = vld [vmem:[#allocation2 + $0x48] sm:$0xff]
        %v544 = vld [vmem:[#allocation2 + $0x50] sm:$0xff]
        %v545 = vld [vmem:[#allocation2 + $0x58] sm:$0xff]
        %v546 = vld [vmem:[#allocation2 + $0x60] sm:$0xff]
        %v547 = vld [vmem:[#allocation2 + $0x68] sm:$0xff]
        %v548 = vld [vmem:[#allocation2 + $0x70] sm:$0xff]
        %v549 = vld [vmem:[#allocation2 + $0x78] sm:$0xff]
        %v550 = vld [vmem:[#allocation2 + $0x80] sm:$0xff]
        %v551 = vld [vmem:[#allocation2 + $0x88] sm:$0xff]
        %v552 = vld [vmem:[#allocation2 + $0x90] sm:$0xff]
        %v553 = vld [vmem:[#allocation2 + $0x98] sm:$0xff]
        %v554 = vld [vmem:[#allocation2 + $0xa0] sm:$0xff]
        %v555 = vld [vmem:[#allocation2 + $0xa8] sm:$0xff]
        %v556 = vld [vmem:[#allocation2 + $0xb0] sm:$0xff]
        %v557 = vld [vmem:[#allocation2 + $0xb8] sm:$0xff]
        %v558 = vld [vmem:[#allocation2 + $0xc0] sm:$0xff]
        %v559 = vld [vmem:[#allocation2 + $0xc8] sm:$0xff]
        %v560 = vld [vmem:[#allocation2 + $0xd0] sm:$0xff]
        %v561 = vld [vmem:[#allocation2 + $0xd8] sm:$0xff]
        %v562 = vld [vmem:[#allocation2 + $0xe0] sm:$0xff]
        %v563 = vld [vmem:[#allocation2 + $0xe8] sm:$0xff]
        %v564 = vld [vmem:[#allocation2 + $0xf0] sm:$0xff]
        %v565 = vld [vmem:[#allocation2 + $0xf8] sm:$0xff]
        %v566 = vpack.c.bf16 %v535, %v534
        %v567 = vpack.c.bf16 %v537, %v536
        %v568 = vpack.c.bf16 %v539, %v538
        %v569 = vpack.c.bf16 %v541, %v540
        %v570 = vpack.c.bf16 %v543, %v542
        %v571 = vpack.c.bf16 %v545, %v544
        %v572 = vpack.c.bf16 %v547, %v546
        %v573 = vpack.c.bf16 %v549, %v548
        %v574 = vpack.c.bf16 %v551, %v550
        %v575 = vpack.c.bf16 %v553, %v552
        %v576 = vpack.c.bf16 %v555, %v554
        %v577 = vpack.c.bf16 %v557, %v556
        %v578 = vpack.c.bf16 %v559, %v558
        %v579 = vpack.c.bf16 %v561, %v560
        %v580 = vpack.c.bf16 %v563, %v562
        %v581 = vpack.c.bf16 %v565, %v564
        %v582 = vld [vmem:[%s2] sm:$0xff]
        %v583 = vld [vmem:[%s2 + $0x8] sm:$0xff]
        %v584 = vld [vmem:[%s2 + $0x10] sm:$0xff]
        %v585 = vld [vmem:[%s2 + $0x18] sm:$0xff]
        %v586 = vld [vmem:[%s2 + $0x20] sm:$0xff]
        %v587 = vld [vmem:[%s2 + $0x28] sm:$0xff]
        %v588 = vld [vmem:[%s2 + $0x30] sm:$0xff]
        %v589 = vld [vmem:[%s2 + $0x38] sm:$0xff]
        %v590 = vld [vmem:[%s3] sm:$0xf]
        %v592 = vlaneseq
        %v593 = vshrl.u32 %v592, 7
        %v594 = vsub.s32 0, %v593
        %v595 = vrot.slane %v590, %v594
        %v596 = vlaneseq
        %v597 = vshrl.u32 %v596, 7
        %v598 = vsub.s32 1, %v597
        %v599 = vrot.slane %v590, %v598
        %v600 = vlaneseq
        %v601 = vshrl.u32 %v600, 7
        %v602 = vsub.s32 2, %v601
        %v603 = vrot.slane %v590, %v602
        %v604 = vlaneseq
        %v605 = vshrl.u32 %v604, 7
        %v606 = vsub.s32 3, %v605
        %v607 = vrot.slane %v590, %v606
        %v620 = vunpack.c.l.b16 %v582
        %v621 = vunpack.c.h.b16 %v582
        %v622 = vunpack.c.l.b16 %v583
        %v623 = vunpack.c.h.b16 %v583
        %v624 = vunpack.c.l.b16 %v584
        %v625 = vunpack.c.h.b16 %v584
        %v626 = vunpack.c.l.b16 %v585
        %v627 = vunpack.c.h.b16 %v585
        %v628 = vunpack.c.l.b16 %v586
        %v629 = vunpack.c.h.b16 %v586
        %v630 = vunpack.c.l.b16 %v587
        %v631 = vunpack.c.h.b16 %v587
        %v632 = vunpack.c.l.b16 %v588
        %v633 = vunpack.c.h.b16 %v588
        %v634 = vunpack.c.l.b16 %v589
        %v635 = vunpack.c.h.b16 %v589
        %v636 = vpack.c.b16 %v624, %v620
        %v637 = vpack.c.b16 %v625, %v621
        %v638 = vpack.c.b16 %v626, %v622
        %v639 = vpack.c.b16 %v627, %v623
        %v640 = vpack.c.b16 %v632, %v628
        %v641 = vpack.c.b16 %v633, %v629
        %v642 = vpack.c.b16 %v634, %v630
        %v643 = vpack.c.b16 %v635, %v631
        %vm652 = vcmask 261120
        %v654 = vsel %vm652, %v566, 0
        %v657 = vsel %vm652, %v567, 0
        %v660 = vsel %vm652, %v568, 0
        %v663 = vsel %vm652, %v569, 0
        %v666 = vsel %vm652, %v570, 0
        %v669 = vsel %vm652, %v571, 0
        %v672 = vsel %vm652, %v572, 0
        %v675 = vsel %vm652, %v573, 0
        %v678 = vsel %vm652, %v574, 0
        %v681 = vsel %vm652, %v575, 0
        %v684 = vsel %vm652, %v576, 0
        %v687 = vsel %vm652, %v577, 0
        %v690 = vsel %vm652, %v578, 0
        %v693 = vsel %vm652, %v579, 0
        %v696 = vsel %vm652, %v580, 0
        %v699 = vsel %vm652, %v581, 0
        %701 = vmatprep.subr.bf16.mxu0 %v637
        %702 = vmatpush1.bf16.msra.mxu0 %v636
        %703 = vmatprep.subr.bf16.mxu0 %v641
        %704 = vmatpush1.bf16.msra.mxu0 %v640
        %705 = vmatprep.subr.bf16.mxu0 0
        %706 = vmatpush1.bf16.msra.mxu0 0
        %707 = vmatprep.subr.bf16.mxu0 0
        %708 = vmatpush1.bf16.msra.mxu0 0
        %709 = vmatprep.subr.bf16.mxu0 0
        %710 = vmatpush1.bf16.msra.mxu0 0
        %711 = vmatprep.subr.bf16.mxu0 0
        %712 = vmatpush1.bf16.msra.mxu0 0
        %713 = vmatprep.subr.bf16.mxu0 0
        %714 = vmatpush1.bf16.msra.mxu0 0
        %715 = vmatprep.subr.bf16.mxu0 0
        %716 = vmatpush1.bf16.msra.mxu0 0
        %717 = vmatprep.subr.bf16.mxu0 0
        %718 = vmatpush1.bf16.msra.mxu0 0
        %719 = vmatprep.subr.bf16.mxu0 0
        %720 = vmatpush1.bf16.msra.mxu0 0
        %721 = vmatprep.subr.bf16.mxu0 0
        %722 = vmatpush1.bf16.msra.mxu0 0
        %723 = vmatprep.subr.bf16.mxu0 0
        %724 = vmatpush1.bf16.msra.mxu0 0
        %725 = vmatprep.subr.bf16.mxu0 0
        %726 = vmatpush1.bf16.msra.mxu0 0
        %727 = vmatprep.subr.bf16.mxu0 0
        %728 = vmatpush1.bf16.msra.mxu0 0
        %729 = vmatprep.subr.bf16.mxu0 0
        %730 = vmatpush1.bf16.msra.mxu0 0
        %731 = vmatprep.subr.bf16.mxu0 0
        %732 = vmatpush1.bf16.msra.mxu0 0
        %733 = vmatprep.mubr.bf16.mxu0 0
        %734 = vmatmul.mubr.bf16.gmra.mrb[0].mxu0 %v654
        %v735 = vpop.f32.mrb[0].mxu0
        %v736 = vadd.f32 %v595, %v735
        %v737 = vpop.f32.mrb[0].mxu0
        %v738 = vadd.f32 %v599, %v737
        %v739 = vpop.f32.mrb[0].mxu0
        %v740 = vadd.f32 %v595, %v739
        %v741 = vpop.f32.mrb[0].mxu0
        %v742 = vadd.f32 %v599, %v741
        %743 = vmatprep.mubr.bf16.mxu0 0
        %744 = vmatmul.mubr.bf16.gmra.mrb[0].mxu0 %v657
        %v745 = vpop.f32.mrb[0].mxu0
        %v746 = vadd.f32 %v595, %v745
        %v747 = vpop.f32.mrb[0].mxu0
        %v748 = vadd.f32 %v599, %v747
        %v749 = vpop.f32.mrb[0].mxu0
        %v750 = vadd.f32 %v595, %v749
        %v751 = vpop.f32.mrb[0].mxu0
        %v752 = vadd.f32 %v599, %v751
        %753 = vmatprep.mubr.bf16.mxu0 0
        %754 = vmatmul.mubr.bf16.gmra.mrb[0].mxu0 %v660
        %v755 = vpop.f32.mrb[0].mxu0
        %v756 = vadd.f32 %v595, %v755
        %v757 = vpop.f32.mrb[0].mxu0
        %v758 = vadd.f32 %v599, %v757
        %v759 = vpop.f32.mrb[0].mxu0
        %v760 = vadd.f32 %v595, %v759
        %v761 = vpop.f32.mrb[0].mxu0
        %v762 = vadd.f32 %v599, %v761
        %763 = vmatprep.mubr.bf16.mxu0 0
        %764 = vmatmul.mubr.bf16.gmra.mrb[0].mxu0 %v663
        %v765 = vpop.f32.mrb[0].mxu0
        %v766 = vadd.f32 %v595, %v765
        %v767 = vpop.f32.mrb[0].mxu0
        %v768 = vadd.f32 %v599, %v767
        %v769 = vpop.f32.mrb[0].mxu0
        %v770 = vadd.f32 %v595, %v769
        %v771 = vpop.f32.mrb[0].mxu0
        %v772 = vadd.f32 %v599, %v771
        %773 = vmatprep.mubr.bf16.mxu0 0
        %774 = vmatmul.mubr.bf16.gmra.mrb[0].mxu0 %v666
        %v775 = vpop.f32.mrb[0].mxu0
        %v776 = vadd.f32 %v595, %v775
        %v777 = vpop.f32.mrb[0].mxu0
        %v778 = vadd.f32 %v599, %v777
        %v779 = vpop.f32.mrb[0].mxu0
        %v780 = vadd.f32 %v595, %v779
        %v781 = vpop.f32.mrb[0].mxu0
        %v782 = vadd.f32 %v599, %v781
        %783 = vmatprep.mubr.bf16.mxu0 0
        %784 = vmatmul.mubr.bf16.gmra.mrb[0].mxu0 %v669
        %v785 = vpop.f32.mrb[0].mxu0
        %v786 = vadd.f32 %v595, %v785
        %v787 = vpop.f32.mrb[0].mxu0
        %v788 = vadd.f32 %v599, %v787
        %v789 = vpop.f32.mrb[0].mxu0
        %v790 = vadd.f32 %v595, %v789
        %v791 = vpop.f32.mrb[0].mxu0
        %v792 = vadd.f32 %v599, %v791
        %793 = vmatprep.mubr.bf16.mxu0 0
        %794 = vmatmul.mubr.bf16.gmra.mrb[0].mxu0 %v672
        %v795 = vpop.f32.mrb[0].mxu0
        %v796 = vadd.f32 %v595, %v795
        %v797 = vpop.f32.mrb[0].mxu0
        %v798 = vadd.f32 %v599, %v797
        %v799 = vpop.f32.mrb[0].mxu0
        %v800 = vadd.f32 %v595, %v799
        %v801 = vpop.f32.mrb[0].mxu0
        %v802 = vadd.f32 %v599, %v801
        %803 = vmatprep.mubr.bf16.mxu0 0
        %804 = vmatmul.mubr.bf16.gmra.mrb[0].mxu0 %v675
        %v805 = vpop.f32.mrb[0].mxu0
        %v806 = vadd.f32 %v595, %v805
        %v807 = vpop.f32.mrb[0].mxu0
        %v808 = vadd.f32 %v599, %v807
        %v809 = vpop.f32.mrb[0].mxu0
        %v810 = vadd.f32 %v595, %v809
        %v811 = vpop.f32.mrb[0].mxu0
        %v812 = vadd.f32 %v599, %v811
        %813 = vmatprep.mubr.bf16.mxu0 0
        %814 = vmatmul.mubr.bf16.gmra.mrb[0].mxu0 %v678
        %v815 = vpop.f32.mrb[0].mxu0
        %v816 = vadd.f32 %v595, %v815
        %v817 = vpop.f32.mrb[0].mxu0
        %v818 = vadd.f32 %v599, %v817
        %v819 = vpop.f32.mrb[0].mxu0
        %v820 = vadd.f32 %v595, %v819
        %v821 = vpop.f32.mrb[0].mxu0
        %v822 = vadd.f32 %v599, %v821
        %823 = vmatprep.mubr.bf16.mxu0 0
        %824 = vmatmul.mubr.bf16.gmra.mrb[0].mxu0 %v681
        %v825 = vpop.f32.mrb[0].mxu0
        %v826 = vadd.f32 %v595, %v825
        %v827 = vpop.f32.mrb[0].mxu0
        %v828 = vadd.f32 %v599, %v827
        %v829 = vpop.f32.mrb[0].mxu0
        %v830 = vadd.f32 %v595, %v829
        %v831 = vpop.f32.mrb[0].mxu0
        %v832 = vadd.f32 %v599, %v831
        %833 = vmatprep.mubr.bf16.mxu0 0
        %834 = vmatmul.mubr.bf16.gmra.mrb[0].mxu0 %v684
        %v835 = vpop.f32.mrb[0].mxu0
        %v836 = vadd.f32 %v595, %v835
        %v837 = vpop.f32.mrb[0].mxu0
        %v838 = vadd.f32 %v599, %v837
        %v839 = vpop.f32.mrb[0].mxu0
        %v840 = vadd.f32 %v595, %v839
        %v841 = vpop.f32.mrb[0].mxu0
        %v842 = vadd.f32 %v599, %v841
        %843 = vmatprep.mubr.bf16.mxu0 0
        %844 = vmatmul.mubr.bf16.gmra.mrb[0].mxu0 %v687
        %v845 = vpop.f32.mrb[0].mxu0
        %v846 = vadd.f32 %v595, %v845
        %v847 = vpop.f32.mrb[0].mxu0
        %v848 = vadd.f32 %v599, %v847
        %v849 = vpop.f32.mrb[0].mxu0
        %v850 = vadd.f32 %v595, %v849
        %v851 = vpop.f32.mrb[0].mxu0
        %v852 = vadd.f32 %v599, %v851
        %853 = vmatprep.mubr.bf16.mxu0 0
        %854 = vmatmul.mubr.bf16.gmra.mrb[0].mxu0 %v690
        %v855 = vpop.f32.mrb[0].mxu0
        %v856 = vadd.f32 %v595, %v855
        %v857 = vpop.f32.mrb[0].mxu0
        %v858 = vadd.f32 %v599, %v857
        %v859 = vpop.f32.mrb[0].mxu0
        %v860 = vadd.f32 %v595, %v859
        %v861 = vpop.f32.mrb[0].mxu0
        %v862 = vadd.f32 %v599, %v861
        %863 = vmatprep.mubr.bf16.mxu0 0
        %864 = vmatmul.mubr.bf16.gmra.mrb[0].mxu0 %v693
        %v865 = vpop.f32.mrb[0].mxu0
        %v866 = vadd.f32 %v595, %v865
        %v867 = vpop.f32.mrb[0].mxu0
        %v868 = vadd.f32 %v599, %v867
        %v869 = vpop.f32.mrb[0].mxu0
        %v870 = vadd.f32 %v595, %v869
        %v871 = vpop.f32.mrb[0].mxu0
        %v872 = vadd.f32 %v599, %v871
        %873 = vmatprep.mubr.bf16.mxu0 0
        %874 = vmatmul.mubr.bf16.gmra.mrb[0].mxu0 %v696
        %v875 = vpop.f32.mrb[0].mxu0
        %v876 = vadd.f32 %v595, %v875
        %v877 = vpop.f32.mrb[0].mxu0
        %v878 = vadd.f32 %v599, %v877
        %v879 = vpop.f32.mrb[0].mxu0
        %v880 = vadd.f32 %v595, %v879
        %v881 = vpop.f32.mrb[0].mxu0
        %v882 = vadd.f32 %v599, %v881
        %883 = vmatprep.mubr.bf16.mxu0 0
        %884 = vmatmul.mubr.bf16.gmra.mrb[0].mxu0 %v699
        %v885 = vpop.f32.mrb[0].mxu0
        %v886 = vadd.f32 %v595, %v885
        %v887 = vpop.f32.mrb[0].mxu0
        %v888 = vadd.f32 %v599, %v887
        %v889 = vpop.f32.mrb[0].mxu0
        %v890 = vadd.f32 %v595, %v889
        %v891 = vpop.f32.mrb[0].mxu0
        %v892 = vadd.f32 %v599, %v891
        %893 = vdwg.mxu0
        %894 = vmatprep.subr.bf16.mxu0 %v639
        %895 = vmatpush1.bf16.msra.mxu0 %v638
        %896 = vmatprep.subr.bf16.mxu0 %v643
        %897 = vmatpush1.bf16.msra.mxu0 %v642
        %898 = vmatprep.subr.bf16.mxu0 0
        %899 = vmatpush1.bf16.msra.mxu0 0
        %900 = vmatprep.subr.bf16.mxu0 0
        %901 = vmatpush1.bf16.msra.mxu0 0
        %902 = vmatprep.subr.bf16.mxu0 0
        %903 = vmatpush1.bf16.msra.mxu0 0
        %904 = vmatprep.subr.bf16.mxu0 0
        %905 = vmatpush1.bf16.msra.mxu0 0
        %906 = vmatprep.subr.bf16.mxu0 0
        %907 = vmatpush1.bf16.msra.mxu0 0
        %908 = vmatprep.subr.bf16.mxu0 0
        %909 = vmatpush1.bf16.msra.mxu0 0
        %910 = vmatprep.subr.bf16.mxu0 0
        %911 = vmatpush1.bf16.msra.mxu0 0
        %912 = vmatprep.subr.bf16.mxu0 0
        %913 = vmatpush1.bf16.msra.mxu0 0
        %914 = vmatprep.subr.bf16.mxu0 0
        %915 = vmatpush1.bf16.msra.mxu0 0
        %916 = vmatprep.subr.bf16.mxu0 0
        %917 = vmatpush1.bf16.msra.mxu0 0
        %918 = vmatprep.subr.bf16.mxu0 0
        %919 = vmatpush1.bf16.msra.mxu0 0
        %920 = vmatprep.subr.bf16.mxu0 0
        %921 = vmatpush1.bf16.msra.mxu0 0
        %922 = vmatprep.subr.bf16.mxu0 0
        %923 = vmatpush1.bf16.msra.mxu0 0
        %924 = vmatprep.subr.bf16.mxu0 0
        %925 = vmatpush1.bf16.msra.mxu0 0
        %926 = vmatprep.mubr.bf16.mxu0 0
        %927 = vmatmul.mubr.bf16.gmra.mrb[0].mxu0 %v654
        %v928 = vpop.f32.mrb[0].mxu0
        %v929 = vadd.f32 %v603, %v928
        %v930 = vpop.f32.mrb[0].mxu0
        %v931 = vadd.f32 %v607, %v930
        %v932 = vpop.f32.mrb[0].mxu0
        %v933 = vadd.f32 %v603, %v932
        %v934 = vpop.f32.mrb[0].mxu0
        %v935 = vadd.f32 %v607, %v934
        %936 = vmatprep.mubr.bf16.mxu0 0
        %937 = vmatmul.mubr.bf16.gmra.mrb[0].mxu0 %v657
        %v938 = vpop.f32.mrb[0].mxu0
        %v939 = vadd.f32 %v603, %v938
        %v940 = vpop.f32.mrb[0].mxu0
        %v941 = vadd.f32 %v607, %v940
        %v942 = vpop.f32.mrb[0].mxu0
        %v943 = vadd.f32 %v603, %v942
        %v944 = vpop.f32.mrb[0].mxu0
        %v945 = vadd.f32 %v607, %v944
        %946 = vmatprep.mubr.bf16.mxu0 0
        %947 = vmatmul.mubr.bf16.gmra.mrb[0].mxu0 %v660
        %v948 = vpop.f32.mrb[0].mxu0
        %v949 = vadd.f32 %v603, %v948
        %v950 = vpop.f32.mrb[0].mxu0
        %v951 = vadd.f32 %v607, %v950
        %v952 = vpop.f32.mrb[0].mxu0
        %v953 = vadd.f32 %v603, %v952
        %v954 = vpop.f32.mrb[0].mxu0
        %v955 = vadd.f32 %v607, %v954
        %956 = vmatprep.mubr.bf16.mxu0 0
        %957 = vmatmul.mubr.bf16.gmra.mrb[0].mxu0 %v663
        %v958 = vpop.f32.mrb[0].mxu0
        %v959 = vadd.f32 %v603, %v958
        %v960 = vpop.f32.mrb[0].mxu0
        %v961 = vadd.f32 %v607, %v960
        %v962 = vpop.f32.mrb[0].mxu0
        %v963 = vadd.f32 %v603, %v962
        %v964 = vpop.f32.mrb[0].mxu0
        %v965 = vadd.f32 %v607, %v964
        %966 = vmatprep.mubr.bf16.mxu0 0
        %967 = vmatmul.mubr.bf16.gmra.mrb[0].mxu0 %v666
        %v968 = vpop.f32.mrb[0].mxu0
        %v969 = vadd.f32 %v603, %v968
        %v970 = vpop.f32.mrb[0].mxu0
        %v971 = vadd.f32 %v607, %v970
        %v972 = vpop.f32.mrb[0].mxu0
        %v973 = vadd.f32 %v603, %v972
        %v974 = vpop.f32.mrb[0].mxu0
        %v975 = vadd.f32 %v607, %v974
        %976 = vmatprep.mubr.bf16.mxu0 0
        %977 = vmatmul.mubr.bf16.gmra.mrb[0].mxu0 %v669
        %v978 = vpop.f32.mrb[0].mxu0
        %v979 = vadd.f32 %v603, %v978
        %v980 = vpop.f32.mrb[0].mxu0
        %v981 = vadd.f32 %v607, %v980
        %v982 = vpop.f32.mrb[0].mxu0
        %v983 = vadd.f32 %v603, %v982
        %v984 = vpop.f32.mrb[0].mxu0
        %v985 = vadd.f32 %v607, %v984
        %986 = vmatprep.mubr.bf16.mxu0 0
        %987 = vmatmul.mubr.bf16.gmra.mrb[0].mxu0 %v672
        %v988 = vpop.f32.mrb[0].mxu0
        %v989 = vadd.f32 %v603, %v988
        %v990 = vpop.f32.mrb[0].mxu0
        %v991 = vadd.f32 %v607, %v990
        %v992 = vpop.f32.mrb[0].mxu0
        %v993 = vadd.f32 %v603, %v992
        %v994 = vpop.f32.mrb[0].mxu0
        %v995 = vadd.f32 %v607, %v994
        %996 = vmatprep.mubr.bf16.mxu0 0
        %997 = vmatmul.mubr.bf16.gmra.mrb[0].mxu0 %v675
        %v998 = vpop.f32.mrb[0].mxu0
        %v999 = vadd.f32 %v603, %v998
        %v1000 = vpop.f32.mrb[0].mxu0
        %v1001 = vadd.f32 %v607, %v1000
        %v1002 = vpop.f32.mrb[0].mxu0
        %v1003 = vadd.f32 %v603, %v1002
        %v1004 = vpop.f32.mrb[0].mxu0
        %v1005 = vadd.f32 %v607, %v1004
        %1006 = vmatprep.mubr.bf16.mxu0 0
        %1007 = vmatmul.mubr.bf16.gmra.mrb[0].mxu0 %v678
        %v1008 = vpop.f32.mrb[0].mxu0
        %v1009 = vadd.f32 %v603, %v1008
        %v1010 = vpop.f32.mrb[0].mxu0
        %v1011 = vadd.f32 %v607, %v1010
        %v1012 = vpop.f32.mrb[0].mxu0
        %v1013 = vadd.f32 %v603, %v1012
        %v1014 = vpop.f32.mrb[0].mxu0
        %v1015 = vadd.f32 %v607, %v1014
        %1016 = vmatprep.mubr.bf16.mxu0 0
        %1017 = vmatmul.mubr.bf16.gmra.mrb[0].mxu0 %v681
        %v1018 = vpop.f32.mrb[0].mxu0
        %v1019 = vadd.f32 %v603, %v1018
        %v1020 = vpop.f32.mrb[0].mxu0
        %v1021 = vadd.f32 %v607, %v1020
        %v1022 = vpop.f32.mrb[0].mxu0
        %v1023 = vadd.f32 %v603, %v1022
        %v1024 = vpop.f32.mrb[0].mxu0
        %v1025 = vadd.f32 %v607, %v1024
        %1026 = vmatprep.mubr.bf16.mxu0 0
        %1027 = vmatmul.mubr.bf16.gmra.mrb[0].mxu0 %v684
        %v1028 = vpop.f32.mrb[0].mxu0
        %v1029 = vadd.f32 %v603, %v1028
        %v1030 = vpop.f32.mrb[0].mxu0
        %v1031 = vadd.f32 %v607, %v1030
        %v1032 = vpop.f32.mrb[0].mxu0
        %v1033 = vadd.f32 %v603, %v1032
        %v1034 = vpop.f32.mrb[0].mxu0
        %v1035 = vadd.f32 %v607, %v1034
        %1036 = vmatprep.mubr.bf16.mxu0 0
        %1037 = vmatmul.mubr.bf16.gmra.mrb[0].mxu0 %v687
        %v1038 = vpop.f32.mrb[0].mxu0
        %v1039 = vadd.f32 %v603, %v1038
        %v1040 = vpop.f32.mrb[0].mxu0
        %v1041 = vadd.f32 %v607, %v1040
        %v1042 = vpop.f32.mrb[0].mxu0
        %v1043 = vadd.f32 %v603, %v1042
        %v1044 = vpop.f32.mrb[0].mxu0
        %v1045 = vadd.f32 %v607, %v1044
        %1046 = vmatprep.mubr.bf16.mxu0 0
        %1047 = vmatmul.mubr.bf16.gmra.mrb[0].mxu0 %v690
        %v1048 = vpop.f32.mrb[0].mxu0
        %v1049 = vadd.f32 %v603, %v1048
        %v1050 = vpop.f32.mrb[0].mxu0
        %v1051 = vadd.f32 %v607, %v1050
        %v1052 = vpop.f32.mrb[0].mxu0
        %v1053 = vadd.f32 %v603, %v1052
        %v1054 = vpop.f32.mrb[0].mxu0
        %v1055 = vadd.f32 %v607, %v1054
        %1056 = vmatprep.mubr.bf16.mxu0 0
        %1057 = vmatmul.mubr.bf16.gmra.mrb[0].mxu0 %v693
        %v1058 = vpop.f32.mrb[0].mxu0
        %v1059 = vadd.f32 %v603, %v1058
        %v1060 = vpop.f32.mrb[0].mxu0
        %v1061 = vadd.f32 %v607, %v1060
        %v1062 = vpop.f32.mrb[0].mxu0
        %v1063 = vadd.f32 %v603, %v1062
        %v1064 = vpop.f32.mrb[0].mxu0
        %v1065 = vadd.f32 %v607, %v1064
        %1066 = vmatprep.mubr.bf16.mxu0 0
        %1067 = vmatmul.mubr.bf16.gmra.mrb[0].mxu0 %v696
        %v1068 = vpop.f32.mrb[0].mxu0
        %v1069 = vadd.f32 %v603, %v1068
        %v1070 = vpop.f32.mrb[0].mxu0
        %v1071 = vadd.f32 %v607, %v1070
        %v1072 = vpop.f32.mrb[0].mxu0
        %v1073 = vadd.f32 %v603, %v1072
        %v1074 = vpop.f32.mrb[0].mxu0
        %v1075 = vadd.f32 %v607, %v1074
        %1076 = vmatprep.mubr.bf16.mxu0 0
        %1077 = vmatmul.mubr.bf16.gmra.mrb[0].mxu0 %v699
        %v1078 = vpop.f32.mrb[0].mxu0
        %v1079 = vadd.f32 %v603, %v1078
        %v1080 = vpop.f32.mrb[0].mxu0
        %v1081 = vadd.f32 %v607, %v1080
        %v1082 = vpop.f32.mrb[0].mxu0
        %v1083 = vadd.f32 %v603, %v1082
        %v1084 = vpop.f32.mrb[0].mxu0
        %v1085 = vadd.f32 %v607, %v1084
        %1086 = vdwg.mxu0
        %v1087 = vmax.f32 %v736, 0.0
        %v1088 = vmax.f32 %v738, 0.0
        %v1089 = vmax.f32 %v929, 0.0
        %v1090 = vmax.f32 %v931, 0.0
        %v1091 = vmax.f32 %v740, 0.0
        %v1092 = vmax.f32 %v742, 0.0
        %v1093 = vmax.f32 %v933, 0.0
        %v1094 = vmax.f32 %v935, 0.0
        %v1095 = vmax.f32 %v746, 0.0
        %v1096 = vmax.f32 %v748, 0.0
        %v1097 = vmax.f32 %v939, 0.0
        %v1098 = vmax.f32 %v941, 0.0
        %v1099 = vmax.f32 %v750, 0.0
        %v1100 = vmax.f32 %v752, 0.0
        %v1101 = vmax.f32 %v943, 0.0
        %v1102 = vmax.f32 %v945, 0.0
        %v1103 = vmax.f32 %v756, 0.0
        %v1104 = vmax.f32 %v758, 0.0
        %v1105 = vmax.f32 %v949, 0.0
        %v1106 = vmax.f32 %v951, 0.0
        %v1107 = vmax.f32 %v760, 0.0
        %v1108 = vmax.f32 %v762, 0.0
        %v1109 = vmax.f32 %v953, 0.0
        %v1110 = vmax.f32 %v955, 0.0
        %v1111 = vmax.f32 %v766, 0.0
        %v1112 = vmax.f32 %v768, 0.0
        %v1113 = vmax.f32 %v959, 0.0
        %v1114 = vmax.f32 %v961, 0.0
        %v1115 = vmax.f32 %v770, 0.0
        %v1116 = vmax.f32 %v772, 0.0
        %v1117 = vmax.f32 %v963, 0.0
        %v1118 = vmax.f32 %v965, 0.0
        %v1119 = vmax.f32 %v776, 0.0
        %v1120 = vmax.f32 %v778, 0.0
        %v1121 = vmax.f32 %v969, 0.0
        %v1122 = vmax.f32 %v971, 0.0
        %v1123 = vmax.f32 %v780, 0.0
        %v1124 = vmax.f32 %v782, 0.0
        %v1125 = vmax.f32 %v973, 0.0
        %v1126 = vmax.f32 %v975, 0.0
        %v1127 = vmax.f32 %v786, 0.0
        %v1128 = vmax.f32 %v788, 0.0
        %v1129 = vmax.f32 %v979, 0.0
        %v1130 = vmax.f32 %v981, 0.0
        %v1131 = vmax.f32 %v790, 0.0
        %v1132 = vmax.f32 %v792, 0.0
        %v1133 = vmax.f32 %v983, 0.0
        %v1134 = vmax.f32 %v985, 0.0
        %v1135 = vmax.f32 %v796, 0.0
        %v1136 = vmax.f32 %v798, 0.0
        %v1137 = vmax.f32 %v989, 0.0
        %v1138 = vmax.f32 %v991, 0.0
        %v1139 = vmax.f32 %v800, 0.0
        %v1140 = vmax.f32 %v802, 0.0
        %v1141 = vmax.f32 %v993, 0.0
        %v1142 = vmax.f32 %v995, 0.0
        %v1143 = vmax.f32 %v806, 0.0
        %v1144 = vmax.f32 %v808, 0.0
        %v1145 = vmax.f32 %v999, 0.0
        %v1146 = vmax.f32 %v1001, 0.0
        %v1147 = vmax.f32 %v810, 0.0
        %v1148 = vmax.f32 %v812, 0.0
        %v1149 = vmax.f32 %v1003, 0.0
        %v1150 = vmax.f32 %v1005, 0.0
        %v1151 = vmax.f32 %v816, 0.0
        %v1152 = vmax.f32 %v818, 0.0
        %v1153 = vmax.f32 %v1009, 0.0
        %v1154 = vmax.f32 %v1011, 0.0
        %v1155 = vmax.f32 %v820, 0.0
        %v1156 = vmax.f32 %v822, 0.0
        %v1157 = vmax.f32 %v1013, 0.0
        %v1158 = vmax.f32 %v1015, 0.0
        %v1159 = vmax.f32 %v826, 0.0
        %v1160 = vmax.f32 %v828, 0.0
        %v1161 = vmax.f32 %v1019, 0.0
        %v1162 = vmax.f32 %v1021, 0.0
        %v1163 = vmax.f32 %v830, 0.0
        %v1164 = vmax.f32 %v832, 0.0
        %v1165 = vmax.f32 %v1023, 0.0
        %v1166 = vmax.f32 %v1025, 0.0
        %v1167 = vmax.f32 %v836, 0.0
        %v1168 = vmax.f32 %v838, 0.0
        %v1169 = vmax.f32 %v1029, 0.0
        %v1170 = vmax.f32 %v1031, 0.0
        %v1171 = vmax.f32 %v840, 0.0
        %v1172 = vmax.f32 %v842, 0.0
        %v1173 = vmax.f32 %v1033, 0.0
        %v1174 = vmax.f32 %v1035, 0.0
        %v1175 = vmax.f32 %v846, 0.0
        %v1176 = vmax.f32 %v848, 0.0
        %v1177 = vmax.f32 %v1039, 0.0
        %v1178 = vmax.f32 %v1041, 0.0
        %v1179 = vmax.f32 %v850, 0.0
        %v1180 = vmax.f32 %v852, 0.0
        %v1181 = vmax.f32 %v1043, 0.0
        %v1182 = vmax.f32 %v1045, 0.0
        %v1183 = vmax.f32 %v856, 0.0
        %v1184 = vmax.f32 %v858, 0.0
        %v1185 = vmax.f32 %v1049, 0.0
        %v1186 = vmax.f32 %v1051, 0.0
        %v1187 = vmax.f32 %v860, 0.0
        %v1188 = vmax.f32 %v862, 0.0
        %v1189 = vmax.f32 %v1053, 0.0
        %v1190 = vmax.f32 %v1055, 0.0
        %v1191 = vmax.f32 %v866, 0.0
        %v1192 = vmax.f32 %v868, 0.0
        %v1193 = vmax.f32 %v1059, 0.0
        %v1194 = vmax.f32 %v1061, 0.0
        %v1195 = vmax.f32 %v870, 0.0
        %v1196 = vmax.f32 %v872, 0.0
        %v1197 = vmax.f32 %v1063, 0.0
        %v1198 = vmax.f32 %v1065, 0.0
        %v1199 = vmax.f32 %v876, 0.0
        %v1200 = vmax.f32 %v878, 0.0
        %v1201 = vmax.f32 %v1069, 0.0
        %v1202 = vmax.f32 %v1071, 0.0
        %v1203 = vmax.f32 %v880, 0.0
        %v1204 = vmax.f32 %v882, 0.0
        %v1205 = vmax.f32 %v1073, 0.0
        %v1206 = vmax.f32 %v1075, 0.0
        %v1207 = vmax.f32 %v886, 0.0
        %v1208 = vmax.f32 %v888, 0.0
        %v1209 = vmax.f32 %v1079, 0.0
        %v1210 = vmax.f32 %v1081, 0.0
        %v1211 = vmax.f32 %v890, 0.0
        %v1212 = vmax.f32 %v892, 0.0
        %v1213 = vmax.f32 %v1083, 0.0
        %v1214 = vmax.f32 %v1085, 0.0
        %v1215 = vpack.c.bf16 %v1091, %v1087
        %v1216 = vpack.c.bf16 %v1092, %v1088
        %v1217 = vpack.c.bf16 %v1093, %v1089
        %v1218 = vpack.c.bf16 %v1094, %v1090
        %v1219 = vpack.c.bf16 %v1099, %v1095
        %v1220 = vpack.c.bf16 %v1100, %v1096
        %v1221 = vpack.c.bf16 %v1101, %v1097
        %v1222 = vpack.c.bf16 %v1102, %v1098
        %v1223 = vpack.c.bf16 %v1107, %v1103
        %v1224 = vpack.c.bf16 %v1108, %v1104
        %v1225 = vpack.c.bf16 %v1109, %v1105
        %v1226 = vpack.c.bf16 %v1110, %v1106
        %v1227 = vpack.c.bf16 %v1115, %v1111
        %v1228 = vpack.c.bf16 %v1116, %v1112
        %v1229 = vpack.c.bf16 %v1117, %v1113
        %v1230 = vpack.c.bf16 %v1118, %v1114
        %v1231 = vpack.c.bf16 %v1123, %v1119
        %v1232 = vpack.c.bf16 %v1124, %v1120
        %v1233 = vpack.c.bf16 %v1125, %v1121
        %v1234 = vpack.c.bf16 %v1126, %v1122
        %v1235 = vpack.c.bf16 %v1131, %v1127
        %v1236 = vpack.c.bf16 %v1132, %v1128
        %v1237 = vpack.c.bf16 %v1133, %v1129
        %v1238 = vpack.c.bf16 %v1134, %v1130
        %v1239 = vpack.c.bf16 %v1139, %v1135
        %v1240 = vpack.c.bf16 %v1140, %v1136
        %v1241 = vpack.c.bf16 %v1141, %v1137
        %v1242 = vpack.c.bf16 %v1142, %v1138
        %v1243 = vpack.c.bf16 %v1147, %v1143
        %v1244 = vpack.c.bf16 %v1148, %v1144
        %v1245 = vpack.c.bf16 %v1149, %v1145
        %v1246 = vpack.c.bf16 %v1150, %v1146
        %v1247 = vpack.c.bf16 %v1155, %v1151
        %v1248 = vpack.c.bf16 %v1156, %v1152
        %v1249 = vpack.c.bf16 %v1157, %v1153
        %v1250 = vpack.c.bf16 %v1158, %v1154
        %v1251 = vpack.c.bf16 %v1163, %v1159
        %v1252 = vpack.c.bf16 %v1164, %v1160
        %v1253 = vpack.c.bf16 %v1165, %v1161
        %v1254 = vpack.c.bf16 %v1166, %v1162
        %v1255 = vpack.c.bf16 %v1171, %v1167
        %v1256 = vpack.c.bf16 %v1172, %v1168
        %v1257 = vpack.c.bf16 %v1173, %v1169
        %v1258 = vpack.c.bf16 %v1174, %v1170
        %v1259 = vpack.c.bf16 %v1179, %v1175
        %v1260 = vpack.c.bf16 %v1180, %v1176
        %v1261 = vpack.c.bf16 %v1181, %v1177
        %v1262 = vpack.c.bf16 %v1182, %v1178
        %v1263 = vpack.c.bf16 %v1187, %v1183
        %v1264 = vpack.c.bf16 %v1188, %v1184
        %v1265 = vpack.c.bf16 %v1189, %v1185
        %v1266 = vpack.c.bf16 %v1190, %v1186
        %v1267 = vpack.c.bf16 %v1195, %v1191
        %v1268 = vpack.c.bf16 %v1196, %v1192
        %v1269 = vpack.c.bf16 %v1197, %v1193
        %v1270 = vpack.c.bf16 %v1198, %v1194
        %v1271 = vpack.c.bf16 %v1203, %v1199
        %v1272 = vpack.c.bf16 %v1204, %v1200
        %v1273 = vpack.c.bf16 %v1205, %v1201
        %v1274 = vpack.c.bf16 %v1206, %v1202
        %v1275 = vpack.c.bf16 %v1211, %v1207
        %v1276 = vpack.c.bf16 %v1212, %v1208
        %v1277 = vpack.c.bf16 %v1213, %v1209
        %v1278 = vpack.c.bf16 %v1214, %v1210
        %v1279 = vld [vmem:[%s4] sm:$0xf]
        %v1280 = vld [vmem:[%s4 + $0x4] sm:$0xf]
        %v1281 = vld [vmem:[%s4 + $0x8] sm:$0xf]
        %v1282 = vld [vmem:[%s4 + $0xc] sm:$0xf]
        %v1283 = vld [vmem:[%s4 + $0x10] sm:$0xf]
        %v1284 = vld [vmem:[%s4 + $0x14] sm:$0xf]
        %v1285 = vld [vmem:[%s4 + $0x18] sm:$0xf]
        %v1286 = vld [vmem:[%s4 + $0x1c] sm:$0xf]
        %v1287 = vld [vmem:[%s4 + $0x20] sm:$0xf]
        %v1288 = vld [vmem:[%s4 + $0x24] sm:$0xf]
        %v1289 = vld [vmem:[%s4 + $0x28] sm:$0xf]
        %v1290 = vld [vmem:[%s4 + $0x2c] sm:$0xf]
        %v1291 = vld [vmem:[%s4 + $0x30] sm:$0xf]
        %v1292 = vld [vmem:[%s4 + $0x34] sm:$0xf]
        %v1293 = vld [vmem:[%s4 + $0x38] sm:$0xf]
        %v1294 = vld [vmem:[%s4 + $0x3c] sm:$0xf]
        %v1295 = vld [vmem:[%s4 + $0x40] sm:$0xf]
        %v1296 = vld [vmem:[%s4 + $0x44] sm:$0xf]
        %v1297 = vld [vmem:[%s4 + $0x48] sm:$0xf]
        %v1298 = vld [vmem:[%s4 + $0x4c] sm:$0xf]
        %v1299 = vld [vmem:[%s4 + $0x50] sm:$0xf]
        %v1300 = vld [vmem:[%s4 + $0x54] sm:$0xf]
        %v1301 = vld [vmem:[%s4 + $0x58] sm:$0xf]
        %v1302 = vld [vmem:[%s4 + $0x5c] sm:$0xf]
        %v1303 = vld [vmem:[%s4 + $0x60] sm:$0xf]
        %v1304 = vld [vmem:[%s4 + $0x64] sm:$0xf]
        %v1305 = vld [vmem:[%s4 + $0x68] sm:$0xf]
        %v1306 = vld [vmem:[%s4 + $0x6c] sm:$0xf]
        %v1307 = vld [vmem:[%s4 + $0x70] sm:$0xf]
        %v1308 = vld [vmem:[%s4 + $0x74] sm:$0xf]
        %v1309 = vld [vmem:[%s4 + $0x78] sm:$0xf]
        %v1310 = vld [vmem:[%s4 + $0x7c] sm:$0xf]
        %v1311 = vld [vmem:[%s4 + $0x80] sm:$0xf]
        %v1312 = vld [vmem:[%s4 + $0x84] sm:$0xf]
        %v1313 = vld [vmem:[%s4 + $0x88] sm:$0xf]
        %v1314 = vld [vmem:[%s4 + $0x8c] sm:$0xf]
        %v1315 = vld [vmem:[%s4 + $0x90] sm:$0xf]
        %v1316 = vld [vmem:[%s4 + $0x94] sm:$0xf]
        %v1317 = vld [vmem:[%s4 + $0x98] sm:$0xf]
        %v1318 = vld [vmem:[%s4 + $0x9c] sm:$0xf]
        %v1319 = vld [vmem:[%s4 + $0xa0] sm:$0xf]
        %v1320 = vld [vmem:[%s4 + $0xa4] sm:$0xf]
        %v1321 = vld [vmem:[%s4 + $0xa8] sm:$0xf]
        %v1322 = vld [vmem:[%s4 + $0xac] sm:$0xf]
        %v1323 = vld [vmem:[%s4 + $0xb0] sm:$0xf]
        %v1324 = vld [vmem:[%s4 + $0xb4] sm:$0xf]
        %v1325 = vld [vmem:[%s4 + $0xb8] sm:$0xf]
        %v1326 = vld [vmem:[%s4 + $0xbc] sm:$0xf]
        %v1327 = vld [vmem:[%s4 + $0xc0] sm:$0xf]
        %v1328 = vld [vmem:[%s4 + $0xc4] sm:$0xf]
        %v1329 = vld [vmem:[%s4 + $0xc8] sm:$0xf]
        %v1330 = vld [vmem:[%s4 + $0xcc] sm:$0xf]
        %v1331 = vld [vmem:[%s4 + $0xd0] sm:$0xf]
        %v1332 = vld [vmem:[%s4 + $0xd4] sm:$0xf]
        %v1333 = vld [vmem:[%s4 + $0xd8] sm:$0xf]
        %v1334 = vld [vmem:[%s4 + $0xdc] sm:$0xf]
        %v1335 = vld [vmem:[%s4 + $0xe0] sm:$0xf]
        %v1336 = vld [vmem:[%s4 + $0xe4] sm:$0xf]
        %v1337 = vld [vmem:[%s4 + $0xe8] sm:$0xf]
        %v1338 = vld [vmem:[%s4 + $0xec] sm:$0xf]
        %v1339 = vld [vmem:[%s4 + $0xf0] sm:$0xf]
        %v1340 = vld [vmem:[%s4 + $0xf4] sm:$0xf]
        %v1341 = vld [vmem:[%s4 + $0xf8] sm:$0xf]
        %v1342 = vld [vmem:[%s4 + $0xfc] sm:$0xf]
        %v1343 = vld [vmem:[%s5] sm:$0x1]
        %v1345 = vlaneseq
        %v1346 = vshrl.u32 %v1345, 7
        %v1347 = vsub.s32 0, %v1346
        %v1348 = vrot.slane %v1343, %v1347
        %v1414 = vunpack.c.l.b16 %v1279
        %v1415 = vunpack.c.l.b16 %v1280
        %v1416 = vunpack.c.l.b16 %v1281
        %v1417 = vunpack.c.l.b16 %v1282
        %v1418 = vunpack.c.l.b16 %v1283
        %v1419 = vunpack.c.l.b16 %v1284
        %v1420 = vunpack.c.l.b16 %v1285
        %v1421 = vunpack.c.l.b16 %v1286
        %v1422 = vunpack.c.l.b16 %v1287
        %v1423 = vunpack.c.l.b16 %v1288
        %v1424 = vunpack.c.l.b16 %v1289
        %v1425 = vunpack.c.l.b16 %v1290
        %v1426 = vunpack.c.l.b16 %v1291
        %v1427 = vunpack.c.l.b16 %v1292
        %v1428 = vunpack.c.l.b16 %v1293
        %v1429 = vunpack.c.l.b16 %v1294
        %v1430 = vunpack.c.l.b16 %v1295
        %v1431 = vunpack.c.l.b16 %v1296
        %v1432 = vunpack.c.l.b16 %v1297
        %v1433 = vunpack.c.l.b16 %v1298
        %v1434 = vunpack.c.l.b16 %v1299
        %v1435 = vunpack.c.l.b16 %v1300
        %v1436 = vunpack.c.l.b16 %v1301
        %v1437 = vunpack.c.l.b16 %v1302
        %v1438 = vunpack.c.l.b16 %v1303
        %v1439 = vunpack.c.l.b16 %v1304
        %v1440 = vunpack.c.l.b16 %v1305
        %v1441 = vunpack.c.l.b16 %v1306
        %v1442 = vunpack.c.l.b16 %v1307
        %v1443 = vunpack.c.l.b16 %v1308
        %v1444 = vunpack.c.l.b16 %v1309
        %v1445 = vunpack.c.l.b16 %v1310
        %v1446 = vunpack.c.l.b16 %v1311
        %v1447 = vunpack.c.l.b16 %v1312
        %v1448 = vunpack.c.l.b16 %v1313
        %v1449 = vunpack.c.l.b16 %v1314
        %v1450 = vunpack.c.l.b16 %v1315
        %v1451 = vunpack.c.l.b16 %v1316
        %v1452 = vunpack.c.l.b16 %v1317
        %v1453 = vunpack.c.l.b16 %v1318
        %v1454 = vunpack.c.l.b16 %v1319
        %v1455 = vunpack.c.l.b16 %v1320
        %v1456 = vunpack.c.l.b16 %v1321
        %v1457 = vunpack.c.l.b16 %v1322
        %v1458 = vunpack.c.l.b16 %v1323
        %v1459 = vunpack.c.l.b16 %v1324
        %v1460 = vunpack.c.l.b16 %v1325
        %v1461 = vunpack.c.l.b16 %v1326
        %v1462 = vunpack.c.l.b16 %v1327
        %v1463 = vunpack.c.l.b16 %v1328
        %v1464 = vunpack.c.l.b16 %v1329
        %v1465 = vunpack.c.l.b16 %v1330
        %v1466 = vunpack.c.l.b16 %v1331
        %v1467 = vunpack.c.l.b16 %v1332
        %v1468 = vunpack.c.l.b16 %v1333
        %v1469 = vunpack.c.l.b16 %v1334
        %v1470 = vunpack.c.l.b16 %v1335
        %v1471 = vunpack.c.l.b16 %v1336
        %v1472 = vunpack.c.l.b16 %v1337
        %v1473 = vunpack.c.l.b16 %v1338
        %v1474 = vunpack.c.l.b16 %v1339
        %v1475 = vunpack.c.l.b16 %v1340
        %v1476 = vunpack.c.l.b16 %v1341
        %v1477 = vunpack.c.l.b16 %v1342
        %v1478 = vpack.c.b16 %v1415, %v1414
        %v1479 = vpack.c.b16 %v1417, %v1416
        %v1480 = vpack.c.b16 %v1419, %v1418
        %v1481 = vpack.c.b16 %v1421, %v1420
        %v1482 = vpack.c.b16 %v1423, %v1422
        %v1483 = vpack.c.b16 %v1425, %v1424
        %v1484 = vpack.c.b16 %v1427, %v1426
        %v1485 = vpack.c.b16 %v1429, %v1428
        %v1486 = vpack.c.b16 %v1431, %v1430
        %v1487 = vpack.c.b16 %v1433, %v1432
        %v1488 = vpack.c.b16 %v1435, %v1434
        %v1489 = vpack.c.b16 %v1437, %v1436
        %v1490 = vpack.c.b16 %v1439, %v1438
        %v1491 = vpack.c.b16 %v1441, %v1440
        %v1492 = vpack.c.b16 %v1443, %v1442
        %v1493 = vpack.c.b16 %v1445, %v1444
        %v1494 = vpack.c.b16 %v1447, %v1446
        %v1495 = vpack.c.b16 %v1449, %v1448
        %v1496 = vpack.c.b16 %v1451, %v1450
        %v1497 = vpack.c.b16 %v1453, %v1452
        %v1498 = vpack.c.b16 %v1455, %v1454
        %v1499 = vpack.c.b16 %v1457, %v1456
        %v1500 = vpack.c.b16 %v1459, %v1458
        %v1501 = vpack.c.b16 %v1461, %v1460
        %v1502 = vpack.c.b16 %v1463, %v1462
        %v1503 = vpack.c.b16 %v1465, %v1464
        %v1504 = vpack.c.b16 %v1467, %v1466
        %v1505 = vpack.c.b16 %v1469, %v1468
        %v1506 = vpack.c.b16 %v1471, %v1470
        %v1507 = vpack.c.b16 %v1473, %v1472
        %v1508 = vpack.c.b16 %v1475, %v1474
        %v1509 = vpack.c.b16 %v1477, %v1476
        %1542 = vmatprep.subr.bf16.mxu0 0
        %1543 = vmatpush1.bf16.msra.mxu0 %v1478
        %1544 = vmatprep.subr.bf16.mxu0 0
        %1545 = vmatpush1.bf16.msra.mxu0 %v1479
        %1546 = vmatprep.subr.bf16.mxu0 0
        %1547 = vmatpush1.bf16.msra.mxu0 %v1480
        %1548 = vmatprep.subr.bf16.mxu0 0
        %1549 = vmatpush1.bf16.msra.mxu0 %v1481
        %1550 = vmatprep.subr.bf16.mxu0 0
        %1551 = vmatpush1.bf16.msra.mxu0 %v1482
        %1552 = vmatprep.subr.bf16.mxu0 0
        %1553 = vmatpush1.bf16.msra.mxu0 %v1483
        %1554 = vmatprep.subr.bf16.mxu0 0
        %1555 = vmatpush1.bf16.msra.mxu0 %v1484
        %1556 = vmatprep.subr.bf16.mxu0 0
        %1557 = vmatpush1.bf16.msra.mxu0 %v1485
        %1558 = vmatprep.subr.bf16.mxu0 0
        %1559 = vmatpush1.bf16.msra.mxu0 %v1486
        %1560 = vmatprep.subr.bf16.mxu0 0
        %1561 = vmatpush1.bf16.msra.mxu0 %v1487
        %1562 = vmatprep.subr.bf16.mxu0 0
        %1563 = vmatpush1.bf16.msra.mxu0 %v1488
        %1564 = vmatprep.subr.bf16.mxu0 0
        %1565 = vmatpush1.bf16.msra.mxu0 %v1489
        %1566 = vmatprep.subr.bf16.mxu0 0
        %1567 = vmatpush1.bf16.msra.mxu0 %v1490
        %1568 = vmatprep.subr.bf16.mxu0 0
        %1569 = vmatpush1.bf16.msra.mxu0 %v1491
        %1570 = vmatprep.subr.bf16.mxu0 0
        %1571 = vmatpush1.bf16.msra.mxu0 %v1492
        %1572 = vmatprep.subr.bf16.mxu0 0
        %1573 = vmatpush1.bf16.msra.mxu0 %v1493
        %1574 = vmatprep.mubr.bf16.mxu0 %v1216
        %1575 = vmatmul.mubr.bf16.gmra.mrb[0].mxu0 %v1215
        %v1576 = vpop.f32.mrb[0].mxu0
        %v1577 = vadd.f32 %v1348, %v1576
        %v1578 = vpop.f32.mrb[0].mxu0
        %v1579 = vpop.f32.mrb[0].mxu0
        %v1580 = vadd.f32 %v1348, %v1579
        %v1581 = vpop.f32.mrb[0].mxu0
        %1582 = vmatprep.mubr.bf16.mxu0 %v1220
        %1583 = vmatmul.mubr.bf16.gmra.mrb[0].mxu0 %v1219
        %v1584 = vpop.f32.mrb[0].mxu0
        %v1585 = vadd.f32 %v1348, %v1584
        %v1586 = vpop.f32.mrb[0].mxu0
        %v1587 = vpop.f32.mrb[0].mxu0
        %v1588 = vadd.f32 %v1348, %v1587
        %v1589 = vpop.f32.mrb[0].mxu0
        %1590 = vmatprep.mubr.bf16.mxu0 %v1224
        %1591 = vmatmul.mubr.bf16.gmra.mrb[0].mxu0 %v1223
        %v1592 = vpop.f32.mrb[0].mxu0
        %v1593 = vadd.f32 %v1348, %v1592
        %v1594 = vpop.f32.mrb[0].mxu0
        %v1595 = vpop.f32.mrb[0].mxu0
        %v1596 = vadd.f32 %v1348, %v1595
        %v1597 = vpop.f32.mrb[0].mxu0
        %1598 = vmatprep.mubr.bf16.mxu0 %v1228
        %1599 = vmatmul.mubr.bf16.gmra.mrb[0].mxu0 %v1227
        %v1600 = vpop.f32.mrb[0].mxu0
        %v1601 = vadd.f32 %v1348, %v1600
        %v1602 = vpop.f32.mrb[0].mxu0
        %v1603 = vpop.f32.mrb[0].mxu0
        %v1604 = vadd.f32 %v1348, %v1603
        %v1605 = vpop.f32.mrb[0].mxu0
        %1606 = vmatprep.mubr.bf16.mxu0 %v1232
        %1607 = vmatmul.mubr.bf16.gmra.mrb[0].mxu0 %v1231
        %v1608 = vpop.f32.mrb[0].mxu0
        %v1609 = vadd.f32 %v1348, %v1608
        %v1610 = vpop.f32.mrb[0].mxu0
        %v1611 = vpop.f32.mrb[0].mxu0
        %v1612 = vadd.f32 %v1348, %v1611
        %v1613 = vpop.f32.mrb[0].mxu0
        %1614 = vmatprep.mubr.bf16.mxu0 %v1236
        %1615 = vmatmul.mubr.bf16.gmra.mrb[0].mxu0 %v1235
        %v1616 = vpop.f32.mrb[0].mxu0
        %v1617 = vadd.f32 %v1348, %v1616
        %v1618 = vpop.f32.mrb[0].mxu0
        %v1619 = vpop.f32.mrb[0].mxu0
        %v1620 = vadd.f32 %v1348, %v1619
        %v1621 = vpop.f32.mrb[0].mxu0
        %1622 = vmatprep.mubr.bf16.mxu0 %v1240
        %1623 = vmatmul.mubr.bf16.gmra.mrb[0].mxu0 %v1239
        %v1624 = vpop.f32.mrb[0].mxu0
        %v1625 = vadd.f32 %v1348, %v1624
        %v1626 = vpop.f32.mrb[0].mxu0
        %v1627 = vpop.f32.mrb[0].mxu0
        %v1628 = vadd.f32 %v1348, %v1627
        %v1629 = vpop.f32.mrb[0].mxu0
        %1630 = vmatprep.mubr.bf16.mxu0 %v1244
        %1631 = vmatmul.mubr.bf16.gmra.mrb[0].mxu0 %v1243
        %v1632 = vpop.f32.mrb[0].mxu0
        %v1633 = vadd.f32 %v1348, %v1632
        %v1634 = vpop.f32.mrb[0].mxu0
        %v1635 = vpop.f32.mrb[0].mxu0
        %v1636 = vadd.f32 %v1348, %v1635
        %v1637 = vpop.f32.mrb[0].mxu0
        %1638 = vmatprep.mubr.bf16.mxu0 %v1248
        %1639 = vmatmul.mubr.bf16.gmra.mrb[0].mxu0 %v1247
        %v1640 = vpop.f32.mrb[0].mxu0
        %v1641 = vadd.f32 %v1348, %v1640
        %v1642 = vpop.f32.mrb[0].mxu0
        %v1643 = vpop.f32.mrb[0].mxu0
        %v1644 = vadd.f32 %v1348, %v1643
        %v1645 = vpop.f32.mrb[0].mxu0
        %1646 = vmatprep.mubr.bf16.mxu0 %v1252
        %1647 = vmatmul.mubr.bf16.gmra.mrb[0].mxu0 %v1251
        %v1648 = vpop.f32.mrb[0].mxu0
        %v1649 = vadd.f32 %v1348, %v1648
        %v1650 = vpop.f32.mrb[0].mxu0
        %v1651 = vpop.f32.mrb[0].mxu0
        %v1652 = vadd.f32 %v1348, %v1651
        %v1653 = vpop.f32.mrb[0].mxu0
        %1654 = vmatprep.mubr.bf16.mxu0 %v1256
        %1655 = vmatmul.mubr.bf16.gmra.mrb[0].mxu0 %v1255
        %v1656 = vpop.f32.mrb[0].mxu0
        %v1657 = vadd.f32 %v1348, %v1656
        %v1658 = vpop.f32.mrb[0].mxu0
        %v1659 = vpop.f32.mrb[0].mxu0
        %v1660 = vadd.f32 %v1348, %v1659
        %v1661 = vpop.f32.mrb[0].mxu0
        %1662 = vmatprep.mubr.bf16.mxu0 %v1260
        %1663 = vmatmul.mubr.bf16.gmra.mrb[0].mxu0 %v1259
        %v1664 = vpop.f32.mrb[0].mxu0
        %v1665 = vadd.f32 %v1348, %v1664
        %v1666 = vpop.f32.mrb[0].mxu0
        %v1667 = vpop.f32.mrb[0].mxu0
        %v1668 = vadd.f32 %v1348, %v1667
        %v1669 = vpop.f32.mrb[0].mxu0
        %1670 = vmatprep.mubr.bf16.mxu0 %v1264
        %1671 = vmatmul.mubr.bf16.gmra.mrb[0].mxu0 %v1263
        %v1672 = vpop.f32.mrb[0].mxu0
        %v1673 = vadd.f32 %v1348, %v1672
        %v1674 = vpop.f32.mrb[0].mxu0
        %v1675 = vpop.f32.mrb[0].mxu0
        %v1676 = vadd.f32 %v1348, %v1675
        %v1677 = vpop.f32.mrb[0].mxu0
        %1678 = vmatprep.mubr.bf16.mxu0 %v1268
        %1679 = vmatmul.mubr.bf16.gmra.mrb[0].mxu0 %v1267
        %v1680 = vpop.f32.mrb[0].mxu0
        %v1681 = vadd.f32 %v1348, %v1680
        %v1682 = vpop.f32.mrb[0].mxu0
        %v1683 = vpop.f32.mrb[0].mxu0
        %v1684 = vadd.f32 %v1348, %v1683
        %v1685 = vpop.f32.mrb[0].mxu0
        %1686 = vmatprep.mubr.bf16.mxu0 %v1272
        %1687 = vmatmul.mubr.bf16.gmra.mrb[0].mxu0 %v1271
        %v1688 = vpop.f32.mrb[0].mxu0
        %v1689 = vadd.f32 %v1348, %v1688
        %v1690 = vpop.f32.mrb[0].mxu0
        %v1691 = vpop.f32.mrb[0].mxu0
        %v1692 = vadd.f32 %v1348, %v1691
        %v1693 = vpop.f32.mrb[0].mxu0
        %1694 = vmatprep.mubr.bf16.mxu0 %v1276
        %1695 = vmatmul.mubr.bf16.gmra.mrb[0].mxu0 %v1275
        %v1696 = vpop.f32.mrb[0].mxu0
        %v1697 = vadd.f32 %v1348, %v1696
        %v1698 = vpop.f32.mrb[0].mxu0
        %v1699 = vpop.f32.mrb[0].mxu0
        %v1700 = vadd.f32 %v1348, %v1699
        %v1701 = vpop.f32.mrb[0].mxu0
        %1702 = vdwg.mxu0
        %1703 = vmatprep.subr.bf16.mxu0 0
        %1704 = vmatpush1.bf16.msra.mxu0 %v1494
        %1705 = vmatprep.subr.bf16.mxu0 0
        %1706 = vmatpush1.bf16.msra.mxu0 %v1495
        %1707 = vmatprep.subr.bf16.mxu0 0
        %1708 = vmatpush1.bf16.msra.mxu0 %v1496
        %1709 = vmatprep.subr.bf16.mxu0 0
        %1710 = vmatpush1.bf16.msra.mxu0 %v1497
        %1711 = vmatprep.subr.bf16.mxu0 0
        %1712 = vmatpush1.bf16.msra.mxu0 %v1498
        %1713 = vmatprep.subr.bf16.mxu0 0
        %1714 = vmatpush1.bf16.msra.mxu0 %v1499
        %1715 = vmatprep.subr.bf16.mxu0 0
        %1716 = vmatpush1.bf16.msra.mxu0 %v1500
        %1717 = vmatprep.subr.bf16.mxu0 0
        %1718 = vmatpush1.bf16.msra.mxu0 %v1501
        %1719 = vmatprep.subr.bf16.mxu0 0
        %1720 = vmatpush1.bf16.msra.mxu0 %v1502
        %1721 = vmatprep.subr.bf16.mxu0 0
        %1722 = vmatpush1.bf16.msra.mxu0 %v1503
        %1723 = vmatprep.subr.bf16.mxu0 0
        %1724 = vmatpush1.bf16.msra.mxu0 %v1504
        %1725 = vmatprep.subr.bf16.mxu0 0
        %1726 = vmatpush1.bf16.msra.mxu0 %v1505
        %1727 = vmatprep.subr.bf16.mxu0 0
        %1728 = vmatpush1.bf16.msra.mxu0 %v1506
        %1729 = vmatprep.subr.bf16.mxu0 0
        %1730 = vmatpush1.bf16.msra.mxu0 %v1507
        %1731 = vmatprep.subr.bf16.mxu0 0
        %1732 = vmatpush1.bf16.msra.mxu0 %v1508
        %1733 = vmatprep.subr.bf16.mxu0 0
        %1734 = vmatpush1.bf16.msra.mxu0 %v1509
        %1735 = vmatprep.mubr.bf16.mxu0 %v1218
        %1736 = vmatmul.mubr.bf16.gmra.mrb[0].mxu0 %v1217
        %v1737 = vpop.f32.mrb[0].mxu0
        %v1738 = vadd.f32 %v1577, %v1737
        %v1739 = vpop.f32.mrb[0].mxu0
        %v1740 = vpop.f32.mrb[0].mxu0
        %v1741 = vadd.f32 %v1580, %v1740
        %v1742 = vpop.f32.mrb[0].mxu0
        %1743 = vmatprep.mubr.bf16.mxu0 %v1222
        %1744 = vmatmul.mubr.bf16.gmra.mrb[0].mxu0 %v1221
        %v1745 = vpop.f32.mrb[0].mxu0
        %v1746 = vadd.f32 %v1585, %v1745
        %v1747 = vpop.f32.mrb[0].mxu0
        %v1748 = vpop.f32.mrb[0].mxu0
        %v1749 = vadd.f32 %v1588, %v1748
        %v1750 = vpop.f32.mrb[0].mxu0
        %1751 = vmatprep.mubr.bf16.mxu0 %v1226
        %1752 = vmatmul.mubr.bf16.gmra.mrb[0].mxu0 %v1225
        %v1753 = vpop.f32.mrb[0].mxu0
        %v1754 = vadd.f32 %v1593, %v1753
        %v1755 = vpop.f32.mrb[0].mxu0
        %v1756 = vpop.f32.mrb[0].mxu0
        %v1757 = vadd.f32 %v1596, %v1756
        %v1758 = vpop.f32.mrb[0].mxu0
        %1759 = vmatprep.mubr.bf16.mxu0 %v1230
        %1760 = vmatmul.mubr.bf16.gmra.mrb[0].mxu0 %v1229
        %v1761 = vpop.f32.mrb[0].mxu0
        %v1762 = vadd.f32 %v1601, %v1761
        %v1763 = vpop.f32.mrb[0].mxu0
        %v1764 = vpop.f32.mrb[0].mxu0
        %v1765 = vadd.f32 %v1604, %v1764
        %v1766 = vpop.f32.mrb[0].mxu0
        %1767 = vmatprep.mubr.bf16.mxu0 %v1234
        %1768 = vmatmul.mubr.bf16.gmra.mrb[0].mxu0 %v1233
        %v1769 = vpop.f32.mrb[0].mxu0
        %v1770 = vadd.f32 %v1609, %v1769
        %v1771 = vpop.f32.mrb[0].mxu0
        %v1772 = vpop.f32.mrb[0].mxu0
        %v1773 = vadd.f32 %v1612, %v1772
        %v1774 = vpop.f32.mrb[0].mxu0
        %1775 = vmatprep.mubr.bf16.mxu0 %v1238
        %1776 = vmatmul.mubr.bf16.gmra.mrb[0].mxu0 %v1237
        %v1777 = vpop.f32.mrb[0].mxu0
        %v1778 = vadd.f32 %v1617, %v1777
        %v1779 = vpop.f32.mrb[0].mxu0
        %v1780 = vpop.f32.mrb[0].mxu0
        %v1781 = vadd.f32 %v1620, %v1780
        %v1782 = vpop.f32.mrb[0].mxu0
        %1783 = vmatprep.mubr.bf16.mxu0 %v1242
        %1784 = vmatmul.mubr.bf16.gmra.mrb[0].mxu0 %v1241
        %v1785 = vpop.f32.mrb[0].mxu0
        %v1786 = vadd.f32 %v1625, %v1785
        %v1787 = vpop.f32.mrb[0].mxu0
        %v1788 = vpop.f32.mrb[0].mxu0
        %v1789 = vadd.f32 %v1628, %v1788
        %v1790 = vpop.f32.mrb[0].mxu0
        %1791 = vmatprep.mubr.bf16.mxu0 %v1246
        %1792 = vmatmul.mubr.bf16.gmra.mrb[0].mxu0 %v1245
        %v1793 = vpop.f32.mrb[0].mxu0
        %v1794 = vadd.f32 %v1633, %v1793
        %v1795 = vpop.f32.mrb[0].mxu0
        %v1796 = vpop.f32.mrb[0].mxu0
        %v1797 = vadd.f32 %v1636, %v1796
        %v1798 = vpop.f32.mrb[0].mxu0
        %1799 = vmatprep.mubr.bf16.mxu0 %v1250
        %1800 = vmatmul.mubr.bf16.gmra.mrb[0].mxu0 %v1249
        %v1801 = vpop.f32.mrb[0].mxu0
        %v1802 = vadd.f32 %v1641, %v1801
        %v1803 = vpop.f32.mrb[0].mxu0
        %v1804 = vpop.f32.mrb[0].mxu0
        %v1805 = vadd.f32 %v1644, %v1804
        %v1806 = vpop.f32.mrb[0].mxu0
        %1807 = vmatprep.mubr.bf16.mxu0 %v1254
        %1808 = vmatmul.mubr.bf16.gmra.mrb[0].mxu0 %v1253
        %v1809 = vpop.f32.mrb[0].mxu0
        %v1810 = vadd.f32 %v1649, %v1809
        %v1811 = vpop.f32.mrb[0].mxu0
        %v1812 = vpop.f32.mrb[0].mxu0
        %v1813 = vadd.f32 %v1652, %v1812
        %v1814 = vpop.f32.mrb[0].mxu0
        %1815 = vmatprep.mubr.bf16.mxu0 %v1258
        %1816 = vmatmul.mubr.bf16.gmra.mrb[0].mxu0 %v1257
        %v1817 = vpop.f32.mrb[0].mxu0
        %v1818 = vadd.f32 %v1657, %v1817
        %v1819 = vpop.f32.mrb[0].mxu0
        %v1820 = vpop.f32.mrb[0].mxu0
        %v1821 = vadd.f32 %v1660, %v1820
        %v1822 = vpop.f32.mrb[0].mxu0
        %1823 = vmatprep.mubr.bf16.mxu0 %v1262
        %1824 = vmatmul.mubr.bf16.gmra.mrb[0].mxu0 %v1261
        %v1825 = vpop.f32.mrb[0].mxu0
        %v1826 = vadd.f32 %v1665, %v1825
        %v1827 = vpop.f32.mrb[0].mxu0
        %v1828 = vpop.f32.mrb[0].mxu0
        %v1829 = vadd.f32 %v1668, %v1828
        %v1830 = vpop.f32.mrb[0].mxu0
        %1831 = vmatprep.mubr.bf16.mxu0 %v1266
        %1832 = vmatmul.mubr.bf16.gmra.mrb[0].mxu0 %v1265
        %v1833 = vpop.f32.mrb[0].mxu0
        %v1834 = vadd.f32 %v1673, %v1833
        %v1835 = vpop.f32.mrb[0].mxu0
        %v1836 = vpop.f32.mrb[0].mxu0
        %v1837 = vadd.f32 %v1676, %v1836
        %v1838 = vpop.f32.mrb[0].mxu0
        %1839 = vmatprep.mubr.bf16.mxu0 %v1270
        %1840 = vmatmul.mubr.bf16.gmra.mrb[0].mxu0 %v1269
        %v1841 = vpop.f32.mrb[0].mxu0
        %v1842 = vadd.f32 %v1681, %v1841
        %v1843 = vpop.f32.mrb[0].mxu0
        %v1844 = vpop.f32.mrb[0].mxu0
        %v1845 = vadd.f32 %v1684, %v1844
        %v1846 = vpop.f32.mrb[0].mxu0
        %1847 = vmatprep.mubr.bf16.mxu0 %v1274
        %1848 = vmatmul.mubr.bf16.gmra.mrb[0].mxu0 %v1273
        %v1849 = vpop.f32.mrb[0].mxu0
        %v1850 = vadd.f32 %v1689, %v1849
        %v1851 = vpop.f32.mrb[0].mxu0
        %v1852 = vpop.f32.mrb[0].mxu0
        %v1853 = vadd.f32 %v1692, %v1852
        %v1854 = vpop.f32.mrb[0].mxu0
        %1855 = vmatprep.mubr.bf16.mxu0 %v1278
        %1856 = vmatmul.mubr.bf16.gmra.mrb[0].mxu0 %v1277
        %v1857 = vpop.f32.mrb[0].mxu0
        %v1858 = vadd.f32 %v1697, %v1857
        %v1859 = vpop.f32.mrb[0].mxu0
        %v1860 = vpop.f32.mrb[0].mxu0
        %v1861 = vadd.f32 %v1700, %v1860
        %v1862 = vpop.f32.mrb[0].mxu0
        %1863 = vdwg.mxu0
        %1864 = vst [vmem:[%s261] sm:$0xff] %v1738
        %1865 = vst [vmem:[%s261 + $0x8] sm:$0xff] %v1741
        %1866 = vst [vmem:[%s261 + $0x10] sm:$0xff] %v1746
        %1867 = vst [vmem:[%s261 + $0x18] sm:$0xff] %v1749
        %1868 = vst [vmem:[%s261 + $0x20] sm:$0xff] %v1754
        %1869 = vst [vmem:[%s261 + $0x28] sm:$0xff] %v1757
        %1870 = vst [vmem:[%s261 + $0x30] sm:$0xff] %v1762
        %1871 = vst [vmem:[%s261 + $0x38] sm:$0xff] %v1765
        %1872 = vst [vmem:[%s261 + $0x40] sm:$0xff] %v1770
        %1873 = vst [vmem:[%s261 + $0x48] sm:$0xff] %v1773
        %1874 = vst [vmem:[%s261 + $0x50] sm:$0xff] %v1778
        %1875 = vst [vmem:[%s261 + $0x58] sm:$0xff] %v1781
        %1876 = vst [vmem:[%s261 + $0x60] sm:$0xff] %v1786
        %1877 = vst [vmem:[%s261 + $0x68] sm:$0xff] %v1789
        %1878 = vst [vmem:[%s261 + $0x70] sm:$0xff] %v1794
        %1879 = vst [vmem:[%s261 + $0x78] sm:$0xff] %v1797
        %1880 = vst [vmem:[%s261 + $0x80] sm:$0xff] %v1802
        %1881 = vst [vmem:[%s261 + $0x88] sm:$0xff] %v1805
        %1882 = vst [vmem:[%s261 + $0x90] sm:$0xff] %v1810
        %1883 = vst [vmem:[%s261 + $0x98] sm:$0xff] %v1813
        %1884 = vst [vmem:[%s261 + $0xa0] sm:$0xff] %v1818
        %1885 = vst [vmem:[%s261 + $0xa8] sm:$0xff] %v1821
        %1886 = vst [vmem:[%s261 + $0xb0] sm:$0xff] %v1826
        %1887 = vst [vmem:[%s261 + $0xb8] sm:$0xff] %v1829
        %1888 = vst [vmem:[%s261 + $0xc0] sm:$0xff] %v1834
        %1889 = vst [vmem:[%s261 + $0xc8] sm:$0xff] %v1837
        %1890 = vst [vmem:[%s261 + $0xd0] sm:$0xff] %v1842
        %1891 = vst [vmem:[%s261 + $0xd8] sm:$0xff] %v1845
        %1892 = vst [vmem:[%s261 + $0xe0] sm:$0xff] %v1850
        %1893 = vst [vmem:[%s261 + $0xe8] sm:$0xff] %v1853
        %1894 = vst [vmem:[%s261 + $0xf0] sm:$0xff] %v1858
        %1895 = vst [vmem:[%s261 + $0xf8] sm:$0xff] %v1861
        %s1896 = sand.u32 %s164, 1
        %s1897 = scalar_lea.sflag [#allocation4], %s1896
        %s1898 = sand.u32 %s164, 1
        %s1899 = smul.addr %s1898, 256
        %s1900 = scalar_lea.vmem [#allocation3], %s1899
        // Predicated region
        $region45: #{tpu_custom_call.1} parent=43 // pred_check
          %p1901 = pneg %p174
        $region46: #{tpu_custom_call.1} parent=43 // pred_check_branch
          %1903 = sbr.rel (%p1901) target = $region48
        $region47: #{tpu_custom_call.1} parent=43 // pred_region
          %s1904 = smul.u32 32, %s20
          %s1906 = ssub.s32 4096, 4096
          %1907 = vsyncadd %s1897, %s1906
          %s1908 = smul.addr %s1904, 128
          %s1909 = scalar_lea.hbm %s6, %s1908
          %s1910 = sshll.u32 %s1900, 4
          %s1911 = int_to_ptr.vmem [resolvable:$true] %s1910
          %1916 = dma.vmem_to_hbm [thread:$0]  %s1911, 4096, %s1909, %s1897, 128, 128, 8
        $region48: #{tpu_custom_call.1} parent=43 // pred_fallthru
          _
      $region44: #{tpu_custom_call.1} parent=5 // pred_fallthru
        _
      %p1917 = scmp.le.s32.totalorder 2, %s15
      // Predicated region
      $region49: #{tpu_custom_call.1} parent=5 // pred_check
        %p1918 = pneg %p1917
      $region50: #{tpu_custom_call.1} parent=5 // pred_check_branch
        %1920 = sbr.rel (%p1918) target = $region52
      $region51: #{tpu_custom_call.1} parent=5 // pred_region
        %s1921 = ssub.s32 %s15, 2
        // Predicated region
        $region53: #{tpu_custom_call.1} parent=51 // pred_check
          %p1922 = pneg %p180
        $region54: #{tpu_custom_call.1} parent=51 // pred_check_branch
          %1924 = sbr.rel (%p1922) target = $region56
        $region55: #{tpu_custom_call.1} parent=51 // pred_region
          %s1925 = sand.u32 %s165, 1
          %s1926 = scalar_lea.sflag [#allocation4], %s1925
          %s1927 = sand.u32 %s165, 1
          %s1928 = smul.addr %s1927, 256
          %s1929 = scalar_lea.vmem [#allocation3], %s1928
          %1930 = dma.done %s1926, 4096
        $region56: #{tpu_custom_call.1} parent=51 // pred_fallthru
          _
      $region52: #{tpu_custom_call.1} parent=5 // pred_fallthru
        _
    $region6: #{tpu_custom_call.1} parent=1 // loop_footer
      %s19 = sadd.s32 1, %s15
    $region7: #{tpu_custom_call.1} parent=1 // loop_footer_branch
      %14 = sbr.rel target = $region3
    $region8: #{tpu_custom_call.1} parent=1 // loop_exit
      _
    %1931 = vsyncpa [#allocation4], 1
    %s1932 = scalar_lea.sflag [#allocation4], 1
    %1933 = vsyncpa %s1932, 1

</llo_original>
